<compile_context>
chip_gen: v5e
topology: v5e:2x2
jax: 0.10.0
libtpu: 0.0.40
codegen_flags: <defaults>
</compile_context>

<pallas_src>
import math

import jax
import jax.numpy as jnp
from jax import lax
from jax.experimental import pallas as pl
from jax.experimental.pallas import tpu as pltpu


# (C_in, C_out, kernel, stride, pad) for conv1..conv4 -- mirrors the PyTorch module.
CONV_CFG = (
    (2, 8, 5, 2, 2),
    (8, 16, 3, 2, 1),
    (16, 32, 3, 2, 1),
    (32, 64, 3, 2, 1),
)
NUM_CLASSES = 10
OUT_PAD = 128          # lane-dense padded logits width (sliced back to 10 in wrapper)
BN_EPS = 1e-5


def _conv_out(size, k, stride, pad):
    return (size + 2 * pad - k) // stride + 1


def _layer_dims(h, w):
    dims = []
    for (c_in, c_out, k, stride, pad) in CONV_CFG:
        h_out = _conv_out(h, k, stride, pad)
        w_out = _conv_out(w, k, stride, pad)
        dims.append(dict(c_in=c_in, c_out=c_out, k=k, stride=stride, pad=pad,
                         h_in=h, w_in=w, h_out=h_out, w_out=w_out))
        h, w = h_out, w_out
    return dims


# ---------------------------------------------------------------------------
# Single fused kernel: 4x (matmul -> +bias -> ReLU -> BN) -> pooled linear
# ---------------------------------------------------------------------------
def _build_fused_kernel(n_layers):
    def kernel(x_ref, *refs):
        o_ref = refs[-1]
        lw_ref = refs[2 * n_layers]       # (hw*64, OUT_PAD) bf16, pool folded in
        lb_ref = refs[2 * n_layers + 1]   # (1, OUT_PAD) f32

        x = x_ref[...]                    # (tn, F0) f32, features in (h, w, c) order
        for li in range(n_layers):
            w_ref = refs[2 * li]          # (F_in, F_out) bf16 dense conv matrix
            e_ref = refs[2 * li + 1]      # (3, 1, F_out) f32: bias / bn-scale / bn-shift
            acc = jnp.dot(x.astype(jnp.bfloat16), w_ref[...],
                          preferred_element_type=jnp.float32)   # one MXU pass / layer
            y = jnp.maximum(acc + e_ref[0], 0.0)                 # Conv bias + ReLU (f32)
            x = y * e_ref[1] + e_ref[2]                          # BatchNorm (eval, f32)

        # AdaptiveAvgPool2d(1) + Linear(64->10): folded into lw_ref (padded to 128 lanes).
        out = jnp.dot(x.astype(jnp.bfloat16), lw_ref[...],
                      preferred_element_type=jnp.float32) + lb_ref[...]
        o_ref[...] = out

    return kernel


def _pick_batch_tile(n):
    if n <= 8:
        return n
    for t in (256, 128, 64, 32, 16, 8):
        if n % t == 0:
            return t
    return n


@jax.jit
def audio_classifier_forward(x, params):
    n, c, h, w = x.shape
    assert c == CONV_CFG[0][0], "expected 2 input channels"
    feat0 = h * w * c

    # Single boundary layout change: NCHW -> (N, H*W*C), features lane-dense.
    x_flat = jnp.transpose(x, (0, 2, 3, 1)).reshape(n, feat0).astype(jnp.float32)

    args = [x_flat]
    for layer in params["convs"]:
        args.append(layer["w_dense"])
        args.append(layer["epi"])
    args.append(params["pool_lin_w"])
    args.append(params["lin_b_pad"])

    tn = _pick_batch_tile(n)
    grid = (n // tn,)

    in_specs = [pl.BlockSpec((tn, feat0), lambda i: (i, 0))]
    for a in args[1:]:
        if a.ndim == 2:
            in_specs.append(pl.BlockSpec(a.shape, lambda i: (0, 0)))
        else:
            in_specs.append(pl.BlockSpec(a.shape, lambda i: (0, 0, 0)))
    out_specs = pl.BlockSpec((tn, OUT_PAD), lambda i: (i, 0))

    out_pad = pl.pallas_call(
        _build_fused_kernel(len(CONV_CFG)),
        out_shape=jax.ShapeDtypeStruct((n, OUT_PAD), jnp.float32),
        grid=grid,
        in_specs=in_specs,
        out_specs=out_specs,
        compiler_params=pltpu.CompilerParams(
            dimension_semantics=("parallel",)),
    )(*args)
    return out_pad[:, :NUM_CLASSES]


# ---------------------------------------------------------------------------
# Parameter init (deterministic; mirrors the module __init__) + all
# per-forward preprocessing hoisted here.
# ---------------------------------------------------------------------------
def kaiming_normal_conv(key, shape, a=0.1):
    c_out, c_in, kh, kw = shape
    fan_in = c_in * kh * kw
    gain = math.sqrt(2.0 / (1.0 + a * a))
    std = gain / math.sqrt(fan_in)
    return std * jax.random.normal(key, shape, dtype=jnp.float32)


def _densify_conv(w_oihw, h_in, w_in, stride, pad):
    """Exact dense (H_in*W_in*C_in, H_out*W_out*C_out) matrix of the conv,
    feature order (h, w, c).  Built once per layer (shape-static)."""
    c_out, c_in, k, _ = w_oihw.shape
    f_in = h_in * w_in * c_in
    eye = jnp.eye(f_in, dtype=jnp.float32).reshape(f_in, h_in, w_in, c_in)
    eye_nchw = jnp.transpose(eye, (0, 3, 1, 2))
    out = lax.conv_general_dilated(
        eye_nchw, w_oihw, window_strides=(stride, stride),
        padding=[(pad, pad), (pad, pad)],
        dimension_numbers=("NCHW", "OIHW", "NCHW"),
        precision=lax.Precision.HIGHEST)            # exact: one-hot inputs
    out = jnp.transpose(out, (0, 2, 3, 1))           # (f_in, h_out, w_out, c_out)
    return out.reshape(f_in, -1)


def make_params(key, h, w):
    dims = _layer_dims(h, w)
    keys = jax.random.split(key, len(CONV_CFG) + 2)
    convs = []
    for idx, d in enumerate(dims):
        c_in, c_out, k = d["c_in"], d["c_out"], d["k"]
        w_oihw = kaiming_normal_conv(keys[idx], (c_out, c_in, k, k), a=0.1)
        b = jnp.zeros((c_out,), jnp.float32)          # conv bias zeroed, as in module
        gamma = jnp.ones((c_out,), jnp.float32)
        beta = jnp.zeros((c_out,), jnp.float32)
        running_mean = jnp.zeros((c_out,), jnp.float32)
        running_var = jnp.ones((c_out,), jnp.float32)

        w_dense = _densify_conv(w_oihw, d["h_in"], d["w_in"],
                                d["stride"], d["pad"]).astype(jnp.bfloat16)
        scale = gamma / jnp.sqrt(running_var + BN_EPS)    # eval-mode BN fold
        shift = beta - running_mean * scale
        hw_out = d["h_out"] * d["w_out"]
        epi = jnp.stack([jnp.tile(b, hw_out),             # tiled to (h, w, c) layout
                         jnp.tile(scale, hw_out),
                         jnp.tile(shift, hw_out)], axis=0).reshape(3, 1, hw_out * c_out)
        convs.append(dict(w_oihw=w_oihw, bias=b, bn_scale=scale, bn_shift=shift,
                          w_dense=w_dense, epi=epi))

    fan_in = CONV_CFG[-1][1]
    bound = 1.0 / math.sqrt(fan_in)
    lin_w = jax.random.uniform(keys[-2], (NUM_CLASSES, fan_in), jnp.float32,
                               -bound, bound)
    lin_b = jax.random.uniform(keys[-1], (NUM_CLASSES,), jnp.float32,
                               -bound, bound)

    # AdaptiveAvgPool2d(1) + Linear folded into one lane-dense (padded) matmul.
    hw_last = dims[-1]["h_out"] * dims[-1]["w_out"]
    pool_lin = jnp.tile(lin_w.T / hw_last, (hw_last, 1))          # (hw*64, 10)
    pool_lin_w = jnp.zeros((hw_last * fan_in, OUT_PAD), jnp.float32)
    pool_lin_w = pool_lin_w.at[:, :NUM_CLASSES].set(pool_lin).astype(jnp.bfloat16)
    lin_b_pad = jnp.zeros((1, OUT_PAD), jnp.float32).at[0, :NUM_CLASSES].set(lin_b)

    return dict(convs=convs, lin_w=lin_w, lin_b=lin_b,
                pool_lin_w=pool_lin_w, lin_b_pad=lin_b_pad)


# ---------------------------------------------------------------------------
# Pure-JAX reference (genuine conv path, HIGHEST precision) for a sanity check.
# ---------------------------------------------------------------------------
def _reference_forward(x, params):
    y = x.astype(jnp.float32)
    for (c_in, c_out, k, stride, pad), layer in zip(CONV_CFG, params["convs"]):
        y = lax.conv_general_dilated(
            y, layer["w_oihw"], window_strides=(stride, stride),
            padding=[(pad, pad), (pad, pad)],
            dimension_numbers=("NCHW", "OIHW", "NCHW"),
            precision=lax.Precision.HIGHEST)
        y = y + layer["bias"][None, :, None, None]
        y = jnp.maximum(y, 0.0)
        y = (y * layer["bn_scale"][None, :, None, None]
             + layer["bn_shift"][None, :, None, None])
    y = y.mean(axis=(2, 3))
    return (jnp.dot(y, params["lin_w"].T, precision=lax.Precision.HIGHEST)
            + params["lin_b"])


if __name__ == "__main__":
    key = jax.random.PRNGKey(0)
    pkey, xkey = jax.random.split(key)
    N, C, H, W = 2, 2, 16, 16      # NCHW: batch=2, stereo spectrogram, 16x16
    params = make_params(pkey, H, W)
    x = jax.random.normal(xkey, (N, C, H, W), dtype=jnp.float32)

    out = jax.block_until_ready(audio_classifier_forward(x, params))
    assert out.shape == (N, NUM_CLASSES), out.shape

    ref = _reference_forward(x, params)
    # Kernel uses bf16 MXU operands (per perf review) with f32 accumulation;
    # tolerance acknowledges bf16 operand semantics vs. the HIGHEST-precision ref.
    assert bool(jnp.allclose(out, ref, rtol=3e-2, atol=3e-2)), (out, ref)

    print("KERNEL_OK")
</pallas_src>

<mosaic_0001>
module attributes {stable_mosaic.version = 11 : i64} {
  func.func @kernel(%arg0: i32, %arg1: memref<2x512xf32, #tpu.memory_space<vmem>>, %arg2: memref<512x512xbf16, #tpu.memory_space<vmem>>, %arg3: memref<3x1x512xf32, #tpu.memory_space<vmem>>, %arg4: memref<512x256xbf16, #tpu.memory_space<vmem>>, %arg5: memref<3x1x256xf32, #tpu.memory_space<vmem>>, %arg6: memref<256x128xbf16, #tpu.memory_space<vmem>>, %arg7: memref<3x1x128xf32, #tpu.memory_space<vmem>>, %arg8: memref<128x64xbf16, #tpu.memory_space<vmem>>, %arg9: memref<3x1x64xf32, #tpu.memory_space<vmem>>, %arg10: memref<64x128xbf16, #tpu.memory_space<vmem>>, %arg11: memref<1x128xf32, #tpu.memory_space<vmem>>, %arg12: memref<2x128xf32, #tpu.memory_space<vmem>>) attributes {dimension_semantics = [#tpu.dimension_semantics<parallel>], iteration_bounds = array<i64: 1>, scalar_prefetch = 0 : i64, scratch_operands = 0 : i64, tpu.core_type = #tpu.core_type<tc>, window_params = [{transform_indices = @transform_0, window_bounds = array<i64: 2, 512>}, {pipeline_mode = #tpu.pipeline_mode<synchronous>, transform_indices = @transform_1, window_bounds = array<i64: 512, 512>}, {pipeline_mode = #tpu.pipeline_mode<synchronous>, transform_indices = @transform_2, window_bounds = array<i64: 3, 1, 512>}, {pipeline_mode = #tpu.pipeline_mode<synchronous>, transform_indices = @transform_3, window_bounds = array<i64: 512, 256>}, {pipeline_mode = #tpu.pipeline_mode<synchronous>, transform_indices = @transform_4, window_bounds = array<i64: 3, 1, 256>}, {pipeline_mode = #tpu.pipeline_mode<synchronous>, transform_indices = @transform_5, window_bounds = array<i64: 256, 128>}, {pipeline_mode = #tpu.pipeline_mode<synchronous>, transform_indices = @transform_6, window_bounds = array<i64: 3, 1, 128>}, {pipeline_mode = #tpu.pipeline_mode<synchronous>, transform_indices = @transform_7, window_bounds = array<i64: 128, 64>}, {pipeline_mode = #tpu.pipeline_mode<synchronous>, transform_indices = @transform_8, window_bounds = array<i64: 3, 1, 64>}, {pipeline_mode = #tpu.pipeline_mode<synchronous>, transform_indices = @transform_9, window_bounds = array<i64: 64, 128>}, {pipeline_mode = #tpu.pipeline_mode<synchronous>, transform_indices = @transform_10, window_bounds = array<i64: 1, 128>}, {transform_indices = @transform_11, window_bounds = array<i64: 2, 128>}]} {
    %c0 = arith.constant 0 : index
    %c0_0 = arith.constant 0 : index
    %0 = vector.load %arg1[%c0, %c0_0] : memref<2x512xf32, #tpu.memory_space<vmem>>, vector<2x512xf32>
    %1 = arith.truncf %0 : vector<2x512xf32> to vector<2x512xbf16>
    %c0_1 = arith.constant 0 : index
    %c0_2 = arith.constant 0 : index
    %2 = vector.load %arg2[%c0_1, %c0_2] : memref<512x512xbf16, #tpu.memory_space<vmem>>, vector<512x512xbf16>
    %cst = arith.constant dense<0.000000e+00> : vector<2x512xf32>
    %3 = tpu.matmul %1, %2, %cst {dimension_numbers = #tpu.dot_dimension_numbers<[1], [0], [0], [1], [0, 0, 1, 1], [], []>} : vector<2x512xbf16>, vector<512x512xbf16>, vector<2x512xf32> -> vector<2x512xf32>
    %c0_3 = arith.constant 0 : index
    %c0_4 = arith.constant 0 : index
    %c0_5 = arith.constant 0 : index
    %4 = vector.load %arg3[%c0_3, %c0_4, %c0_5] : memref<3x1x512xf32, #tpu.memory_space<vmem>>, vector<1x1x512xf32>
    %5 = vector.shape_cast %4 : vector<1x1x512xf32> to vector<1x512xf32>
    %6 = vector.broadcast %5 : vector<1x512xf32> to vector<2x512xf32>
    %7 = arith.addf %3, %6 : vector<2x512xf32>
    %cst_6 = arith.constant 0.000000e+00 : f32
    %8 = vector.broadcast %cst_6 : f32 to vector<2x512xf32>
    %9 = arith.maximumf %7, %8 : vector<2x512xf32>
    %c1 = arith.constant 1 : index
    %c0_7 = arith.constant 0 : index
    %c0_8 = arith.constant 0 : index
    %10 = vector.load %arg3[%c1, %c0_7, %c0_8] : memref<3x1x512xf32, #tpu.memory_space<vmem>>, vector<1x1x512xf32>
    %11 = vector.shape_cast %10 : vector<1x1x512xf32> to vector<1x512xf32>
    %12 = vector.broadcast %11 : vector<1x512xf32> to vector<2x512xf32>
    %13 = arith.mulf %9, %12 : vector<2x512xf32>
    %c2 = arith.constant 2 : index
    %c0_9 = arith.constant 0 : index
    %c0_10 = arith.constant 0 : index
    %14 = vector.load %arg3[%c2, %c0_9, %c0_10] : memref<3x1x512xf32, #tpu.memory_space<vmem>>, vector<1x1x512xf32>
    %15 = vector.shape_cast %14 : vector<1x1x512xf32> to vector<1x512xf32>
    %16 = vector.broadcast %15 : vector<1x512xf32> to vector<2x512xf32>
    %17 = arith.addf %13, %16 : vector<2x512xf32>
    %18 = arith.truncf %17 : vector<2x512xf32> to vector<2x512xbf16>
    %c0_11 = arith.constant 0 : index
    %c0_12 = arith.constant 0 : index
    %19 = vector.load %arg4[%c0_11, %c0_12] : memref<512x256xbf16, #tpu.memory_space<vmem>>, vector<512x256xbf16>
    %cst_13 = arith.constant dense<0.000000e+00> : vector<2x256xf32>
    %20 = tpu.matmul %18, %19, %cst_13 {dimension_numbers = #tpu.dot_dimension_numbers<[1], [0], [0], [1], [0, 0, 1, 1], [], []>} : vector<2x512xbf16>, vector<512x256xbf16>, vector<2x256xf32> -> vector<2x256xf32>
    %c0_14 = arith.constant 0 : index
    %c0_15 = arith.constant 0 : index
    %c0_16 = arith.constant 0 : index
    %21 = vector.load %arg5[%c0_14, %c0_15, %c0_16] : memref<3x1x256xf32, #tpu.memory_space<vmem>>, vector<1x1x256xf32>
    %22 = vector.shape_cast %21 : vector<1x1x256xf32> to vector<1x256xf32>
    %23 = vector.broadcast %22 : vector<1x256xf32> to vector<2x256xf32>
    %24 = arith.addf %20, %23 : vector<2x256xf32>
    %cst_17 = arith.constant 0.000000e+00 : f32
    %25 = vector.broadcast %cst_17 : f32 to vector<2x256xf32>
    %26 = arith.maximumf %24, %25 : vector<2x256xf32>
    %c1_18 = arith.constant 1 : index
    %c0_19 = arith.constant 0 : index
    %c0_20 = arith.constant 0 : index
    %27 = vector.load %arg5[%c1_18, %c0_19, %c0_20] : memref<3x1x256xf32, #tpu.memory_space<vmem>>, vector<1x1x256xf32>
    %28 = vector.shape_cast %27 : vector<1x1x256xf32> to vector<1x256xf32>
    %29 = vector.broadcast %28 : vector<1x256xf32> to vector<2x256xf32>
    %30 = arith.mulf %26, %29 : vector<2x256xf32>
    %c2_21 = arith.constant 2 : index
    %c0_22 = arith.constant 0 : index
    %c0_23 = arith.constant 0 : index
    %31 = vector.load %arg5[%c2_21, %c0_22, %c0_23] : memref<3x1x256xf32, #tpu.memory_space<vmem>>, vector<1x1x256xf32>
    %32 = vector.shape_cast %31 : vector<1x1x256xf32> to vector<1x256xf32>
    %33 = vector.broadcast %32 : vector<1x256xf32> to vector<2x256xf32>
    %34 = arith.addf %30, %33 : vector<2x256xf32>
    %35 = arith.truncf %34 : vector<2x256xf32> to vector<2x256xbf16>
    %c0_24 = arith.constant 0 : index
    %c0_25 = arith.constant 0 : index
    %36 = vector.load %arg6[%c0_24, %c0_25] : memref<256x128xbf16, #tpu.memory_space<vmem>>, vector<256x128xbf16>
    %cst_26 = arith.constant dense<0.000000e+00> : vector<2x128xf32>
    %37 = tpu.matmul %35, %36, %cst_26 {dimension_numbers = #tpu.dot_dimension_numbers<[1], [0], [0], [1], [0, 0, 1, 1], [], []>} : vector<2x256xbf16>, vector<256x128xbf16>, vector<2x128xf32> -> vector<2x128xf32>
    %c0_27 = arith.constant 0 : index
    %c0_28 = arith.constant 0 : index
    %c0_29 = arith.constant 0 : index
    %38 = vector.load %arg7[%c0_27, %c0_28, %c0_29] : memref<3x1x128xf32, #tpu.memory_space<vmem>>, vector<1x1x128xf32>
    %39 = vector.shape_cast %38 : vector<1x1x128xf32> to vector<1x128xf32>
    %40 = vector.broadcast %39 : vector<1x128xf32> to vector<2x128xf32>
    %41 = arith.addf %37, %40 : vector<2x128xf32>
    %cst_30 = arith.constant 0.000000e+00 : f32
    %42 = vector.broadcast %cst_30 : f32 to vector<2x128xf32>
    %43 = arith.maximumf %41, %42 : vector<2x128xf32>
    %c1_31 = arith.constant 1 : index
    %c0_32 = arith.constant 0 : index
    %c0_33 = arith.constant 0 : index
    %44 = vector.load %arg7[%c1_31, %c0_32, %c0_33] : memref<3x1x128xf32, #tpu.memory_space<vmem>>, vector<1x1x128xf32>
    %45 = vector.shape_cast %44 : vector<1x1x128xf32> to vector<1x128xf32>
    %46 = vector.broadcast %45 : vector<1x128xf32> to vector<2x128xf32>
    %47 = arith.mulf %43, %46 : vector<2x128xf32>
    %c2_34 = arith.constant 2 : index
    %c0_35 = arith.constant 0 : index
    %c0_36 = arith.constant 0 : index
    %48 = vector.load %arg7[%c2_34, %c0_35, %c0_36] : memref<3x1x128xf32, #tpu.memory_space<vmem>>, vector<1x1x128xf32>
    %49 = vector.shape_cast %48 : vector<1x1x128xf32> to vector<1x128xf32>
    %50 = vector.broadcast %49 : vector<1x128xf32> to vector<2x128xf32>
    %51 = arith.addf %47, %50 : vector<2x128xf32>
    %52 = arith.truncf %51 : vector<2x128xf32> to vector<2x128xbf16>
    %c0_37 = arith.constant 0 : index
    %c0_38 = arith.constant 0 : index
    %53 = vector.load %arg8[%c0_37, %c0_38] : memref<128x64xbf16, #tpu.memory_space<vmem>>, vector<128x64xbf16>
    %cst_39 = arith.constant dense<0.000000e+00> : vector<2x64xf32>
    %54 = tpu.matmul %52, %53, %cst_39 {dimension_numbers = #tpu.dot_dimension_numbers<[1], [0], [0], [1], [0, 0, 1, 1], [], []>} : vector<2x128xbf16>, vector<128x64xbf16>, vector<2x64xf32> -> vector<2x64xf32>
    %c0_40 = arith.constant 0 : index
    %c0_41 = arith.constant 0 : index
    %c0_42 = arith.constant 0 : index
    %55 = vector.load %arg9[%c0_40, %c0_41, %c0_42] : memref<3x1x64xf32, #tpu.memory_space<vmem>>, vector<1x1x64xf32>
    %56 = vector.shape_cast %55 : vector<1x1x64xf32> to vector<1x64xf32>
    %57 = vector.broadcast %56 : vector<1x64xf32> to vector<2x64xf32>
    %58 = arith.addf %54, %57 : vector<2x64xf32>
    %cst_43 = arith.constant 0.000000e+00 : f32
    %59 = vector.broadcast %cst_43 : f32 to vector<2x64xf32>
    %60 = arith.maximumf %58, %59 : vector<2x64xf32>
    %c1_44 = arith.constant 1 : index
    %c0_45 = arith.constant 0 : index
    %c0_46 = arith.constant 0 : index
    %61 = vector.load %arg9[%c1_44, %c0_45, %c0_46] : memref<3x1x64xf32, #tpu.memory_space<vmem>>, vector<1x1x64xf32>
    %62 = vector.shape_cast %61 : vector<1x1x64xf32> to vector<1x64xf32>
    %63 = vector.broadcast %62 : vector<1x64xf32> to vector<2x64xf32>
    %64 = arith.mulf %60, %63 : vector<2x64xf32>
    %c2_47 = arith.constant 2 : index
    %c0_48 = arith.constant 0 : index
    %c0_49 = arith.constant 0 : index
    %65 = vector.load %arg9[%c2_47, %c0_48, %c0_49] : memref<3x1x64xf32, #tpu.memory_space<vmem>>, vector<1x1x64xf32>
    %66 = vector.shape_cast %65 : vector<1x1x64xf32> to vector<1x64xf32>
    %67 = vector.broadcast %66 : vector<1x64xf32> to vector<2x64xf32>
    %68 = arith.addf %64, %67 : vector<2x64xf32>
    %69 = arith.truncf %68 : vector<2x64xf32> to vector<2x64xbf16>
    %c0_50 = arith.constant 0 : index
    %c0_51 = arith.constant 0 : index
    %70 = vector.load %arg10[%c0_50, %c0_51] : memref<64x128xbf16, #tpu.memory_space<vmem>>, vector<64x128xbf16>
    %cst_52 = arith.constant dense<0.000000e+00> : vector<2x128xf32>
    %71 = tpu.matmul %69, %70, %cst_52 {dimension_numbers = #tpu.dot_dimension_numbers<[1], [0], [0], [1], [0, 0, 1, 1], [], []>} : vector<2x64xbf16>, vector<64x128xbf16>, vector<2x128xf32> -> vector<2x128xf32>
    %c0_53 = arith.constant 0 : index
    %c0_54 = arith.constant 0 : index
    %72 = vector.load %arg11[%c0_53, %c0_54] : memref<1x128xf32, #tpu.memory_space<vmem>>, vector<1x128xf32>
    %73 = vector.broadcast %72 : vector<1x128xf32> to vector<2x128xf32>
    %74 = arith.addf %71, %73 : vector<2x128xf32>
    %c0_55 = arith.constant 0 : index
    %c0_56 = arith.constant 0 : index
    %75 = vector.load %arg12[%c0_55, %c0_56] : memref<2x128xf32, #tpu.memory_space<vmem>>, vector<2x128xf32>
    tpu.vector_store %arg12[%c0_55, %c0_56], %74 {strides = array<i32>} : memref<2x128xf32, #tpu.memory_space<vmem>>, vector<2x128xf32>,
    return
  }
  func.func @transform_0(%arg0: i32) -> (i32, i32) {
    %c0_i32 = arith.constant 0 : i32
    %c0_i32_0 = arith.constant 0 : i32
    return %arg0, %c0_i32 : i32, i32
  }
  func.func @transform_1(%arg0: i32) -> (i32, i32) {
    %c0_i32 = arith.constant 0 : i32
    %c0_i32_0 = arith.constant 0 : i32
    %c0_i32_1 = arith.constant 0 : i32
    return %c0_i32, %c0_i32_0 : i32, i32
  }
  func.func @transform_2(%arg0: i32) -> (i32, i32, i32) {
    %c0_i32 = arith.constant 0 : i32
    %c0_i32_0 = arith.constant 0 : i32
    %c0_i32_1 = arith.constant 0 : i32
    %c0_i32_2 = arith.constant 0 : i32
    return %c0_i32, %c0_i32_0, %c0_i32_1 : i32, i32, i32
  }
  func.func @transform_3(%arg0: i32) -> (i32, i32) {
    %c0_i32 = arith.constant 0 : i32
    %c0_i32_0 = arith.constant 0 : i32
    %c0_i32_1 = arith.constant 0 : i32
    return %c0_i32, %c0_i32_0 : i32, i32
  }
  func.func @transform_4(%arg0: i32) -> (i32, i32, i32) {
    %c0_i32 = arith.constant 0 : i32
    %c0_i32_0 = arith.constant 0 : i32
    %c0_i32_1 = arith.constant 0 : i32
    %c0_i32_2 = arith.constant 0 : i32
    return %c0_i32, %c0_i32_0, %c0_i32_1 : i32, i32, i32
  }
  func.func @transform_5(%arg0: i32) -> (i32, i32) {
    %c0_i32 = arith.constant 0 : i32
    %c0_i32_0 = arith.constant 0 : i32
    %c0_i32_1 = arith.constant 0 : i32
    return %c0_i32, %c0_i32_0 : i32, i32
  }
  func.func @transform_6(%arg0: i32) -> (i32, i32, i32) {
    %c0_i32 = arith.constant 0 : i32
    %c0_i32_0 = arith.constant 0 : i32
    %c0_i32_1 = arith.constant 0 : i32
    %c0_i32_2 = arith.constant 0 : i32
    return %c0_i32, %c0_i32_0, %c0_i32_1 : i32, i32, i32
  }
  func.func @transform_7(%arg0: i32) -> (i32, i32) {
    %c0_i32 = arith.constant 0 : i32
    %c0_i32_0 = arith.constant 0 : i32
    %c0_i32_1 = arith.constant 0 : i32
    return %c0_i32, %c0_i32_0 : i32, i32
  }
  func.func @transform_8(%arg0: i32) -> (i32, i32, i32) {
    %c0_i32 = arith.constant 0 : i32
    %c0_i32_0 = arith.constant 0 : i32
    %c0_i32_1 = arith.constant 0 : i32
    %c0_i32_2 = arith.constant 0 : i32
    return %c0_i32, %c0_i32_0, %c0_i32_1 : i32, i32, i32
  }
  func.func @transform_9(%arg0: i32) -> (i32, i32) {
    %c0_i32 = arith.constant 0 : i32
    %c0_i32_0 = arith.constant 0 : i32
    %c0_i32_1 = arith.constant 0 : i32
    return %c0_i32, %c0_i32_0 : i32, i32
  }
  func.func @transform_10(%arg0: i32) -> (i32, i32) {
    %c0_i32 = arith.constant 0 : i32
    %c0_i32_0 = arith.constant 0 : i32
    %c0_i32_1 = arith.constant 0 : i32
    return %c0_i32, %c0_i32_0 : i32, i32
  }
  func.func @transform_11(%arg0: i32) -> (i32, i32) {
    %c0_i32 = arith.constant 0 : i32
    %c0_i32_0 = arith.constant 0 : i32
    return %arg0, %c0_i32 : i32, i32
  }
}

</mosaic_0001>

<llo_original>
// kernel: audio_classifier_forward.1
$region0: #{audio_classifier_forward.1}
  #allocation0 [shape = 'u32[]', space=smem, size = 0x4, offset = 0x4, fixed_abs, tag = 'smem constant byte address 0x4 - core index']
  #allocation1 [shape = 'u32[72,128]{1,0:T(1,128)}', space=vmem, size = 0x9000, scoped, tag = 'internal scratch']
  %s0 = inlined_call_operand.vmem [shape: f32[2,512], index: 0, kind: input, shape index: {}]
  %s1 = inlined_call_operand.vmem [shape: bf16[512,512], index: 1, kind: input, shape index: {}]
  %s2 = inlined_call_operand.vmem [shape: f32[3,1,512], index: 2, kind: input, shape index: {}]
  %s3 = inlined_call_operand.hbm [shape: bf16[512,256], index: 3, kind: input, shape index: {}]
  %s4 = inlined_call_operand.hbm [shape: f32[3,1,256], index: 4, kind: input, shape index: {}]
  %s5 = inlined_call_operand.vmem [shape: bf16[256,128], index: 5, kind: input, shape index: {}]
  %s6 = inlined_call_operand.vmem [shape: f32[3,1,128], index: 6, kind: input, shape index: {}]
  %s7 = inlined_call_operand.vmem [shape: bf16[128,64], index: 7, kind: input, shape index: {}]
  %s8 = inlined_call_operand.hbm [shape: f32[3,1,64], index: 8, kind: input, shape index: {}]
  %s9 = inlined_call_operand.hbm [shape: bf16[64,128], index: 9, kind: input, shape index: {}]
  %s10 = inlined_call_operand.hbm [shape: f32[1,128], index: 10, kind: input, shape index: {}]
  %s11 = inlined_call_operand.hbm [shape: f32[2,128], index: 11, kind: output, shape index: {}]
  %s12 = sld [smem:[#allocation0]]
  $region74: #{audio_classifier_forward.1} parent=0
    _
  %s14 = ssub.s32 1, %s12
  %s15 = scalar_select 0, %s14, %s12
  $region1: #{audio_classifier_forward.1} parent=0
    #allocation2 [shape = 'u8[262144]{0}', space=vmem, size = 0x40000, scoped, tag = 'input window, operand 3, single buffered']
    #allocation3 [shape = 's32[1]{0}', space=sflag, size = 0x4, scoped, tag = 'scoped memory for audio_classifier_forward.1']
    #allocation4 [shape = 's32[1]{0}', space=sflag, size = 0x4, scoped, tag = 'scoped memory for audio_classifier_forward.1']
    #allocation5 [shape = 'u8[3072]{0}', space=vmem, size = 0xc00, scoped, tag = 'input window, operand 4, single buffered']
    #allocation6 [shape = 's32[1]{0}', space=sflag, size = 0x4, scoped, tag = 'scoped memory for audio_classifier_forward.1']
    #allocation7 [shape = 'u8[1536]{0}', space=vmem, size = 0x800, scoped, tag = 'input window, operand 8, single buffered']
    #allocation8 [shape = 'u8[16384]{0}', space=vmem, size = 0x4000, scoped, tag = 'input window, operand 9, single buffered']
    #allocation9 [shape = 's32[1]{0}', space=sflag, size = 0x4, scoped, tag = 'scoped memory for audio_classifier_forward.1']
    #allocation10 [shape = 'u8[512]{0}', space=vmem, size = 0x400, scoped, tag = 'input window, operand 10, single buffered']
    #allocation11 [shape = 'u8[1024]{0}', space=vmem, size = 0x400, scoped, tag = 'output window, operand 0, single buffered']
    %16 = vsyncpa [#allocation3], 0
    %17 = vsyncpa [#allocation6], 0
    %18 = vsyncpa [#allocation9], 0
    %19 = vsyncpa [#allocation4], 0
    // Predicated region
    $region2: #{audio_classifier_forward.1} parent=1 // pred_check
      _
    $region3: #{audio_classifier_forward.1} parent=1 // pred_check_branch
      %21 = sbr.rel (0) target = $region5
    $region4: #{audio_classifier_forward.1} parent=1 // pred_region
      _
    $region5: #{audio_classifier_forward.1} parent=1 // pred_fallthru
      _
    // Predicated region
    $region6: #{audio_classifier_forward.1} parent=1 // pred_check
      _
    $region7: #{audio_classifier_forward.1} parent=1 // pred_check_branch
      %23 = sbr.rel (0) target = $region9
    $region8: #{audio_classifier_forward.1} parent=1 // pred_region
      _
    $region9: #{audio_classifier_forward.1} parent=1 // pred_fallthru
      _
    // Predicated region
    $region10: #{audio_classifier_forward.1} parent=1 // pred_check
      _
    $region11: #{audio_classifier_forward.1} parent=1 // pred_check_branch
      %25 = sbr.rel (0) target = $region13
    $region12: #{audio_classifier_forward.1} parent=1 // pred_region
      _
    $region13: #{audio_classifier_forward.1} parent=1 // pred_fallthru
      _
    // Predicated region
    $region14: #{audio_classifier_forward.1} parent=1 // pred_check
      _
    $region15: #{audio_classifier_forward.1} parent=1 // pred_check_branch
      %27 = sbr.rel (0) target = $region17
    $region16: #{audio_classifier_forward.1} parent=1 // pred_region
      %29 = vsyncadd [#allocation3], 0
      %s30 = sshll.u32 %s3, 4
      %s31 = int_to_ptr.hbm [resolvable:$true] %s30
      %s32 = sshll.u32 [#allocation2], 4
      %s33 = int_to_ptr.vmem [resolvable:$true] %s32
      %38 = dma.hbm_to_vmem [thread:$0]  %s31, 8192, %s33, [#allocation3], 128, 128, 8
    $region17: #{audio_classifier_forward.1} parent=1 // pred_fallthru
      _
    // Predicated region
    $region18: #{audio_classifier_forward.1} parent=1 // pred_check
      _
    $region19: #{audio_classifier_forward.1} parent=1 // pred_check_branch
      %40 = sbr.rel (0) target = $region21
    $region20: #{audio_classifier_forward.1} parent=1 // pred_region
      %42 = vsyncadd [#allocation6], 0
      %s43 = sshll.u32 %s4, 4
      %s44 = int_to_ptr.hbm [resolvable:$true] %s43
      %s45 = sshll.u32 [#allocation5], 4
      %s46 = int_to_ptr.vmem [resolvable:$true] %s45
      %51 = dma.hbm_to_vmem [thread:$0]  %s44, 96, %s46, [#allocation6], 32, 32, 2
    $region21: #{audio_classifier_forward.1} parent=1 // pred_fallthru
      _
    // Predicated region
    $region22: #{audio_classifier_forward.1} parent=1 // pred_check
      _
    $region23: #{audio_classifier_forward.1} parent=1 // pred_check_branch
      %53 = sbr.rel (0) target = $region25
    $region24: #{audio_classifier_forward.1} parent=1 // pred_region
      _
    $region25: #{audio_classifier_forward.1} parent=1 // pred_fallthru
      _
    // Predicated region
    $region26: #{audio_classifier_forward.1} parent=1 // pred_check
      _
    $region27: #{audio_classifier_forward.1} parent=1 // pred_check_branch
      %55 = sbr.rel (0) target = $region29
    $region28: #{audio_classifier_forward.1} parent=1 // pred_region
      _
    $region29: #{audio_classifier_forward.1} parent=1 // pred_fallthru
      _
    // Predicated region
    $region30: #{audio_classifier_forward.1} parent=1 // pred_check
      _
    $region31: #{audio_classifier_forward.1} parent=1 // pred_check_branch
      %57 = sbr.rel (0) target = $region33
    $region32: #{audio_classifier_forward.1} parent=1 // pred_region
      _
    $region33: #{audio_classifier_forward.1} parent=1 // pred_fallthru
      _
    // Predicated region
    $region34: #{audio_classifier_forward.1} parent=1 // pred_check
      _
    $region35: #{audio_classifier_forward.1} parent=1 // pred_check_branch
      %59 = sbr.rel (0) target = $region37
    $region36: #{audio_classifier_forward.1} parent=1 // pred_region
      %61 = vsyncadd [#allocation6], 0
      %s62 = sshll.u32 %s8, 4
      %s63 = int_to_ptr.hbm [resolvable:$true] %s62
      %s64 = sshll.u32 [#allocation7], 4
      %s65 = int_to_ptr.vmem [resolvable:$true] %s64
      %70 = dma.hbm_to_vmem [thread:$0]  %s63, 48, %s65, [#allocation6], 16, 16, 1
    $region37: #{audio_classifier_forward.1} parent=1 // pred_fallthru
      _
    // Predicated region
    $region38: #{audio_classifier_forward.1} parent=1 // pred_check
      _
    $region39: #{audio_classifier_forward.1} parent=1 // pred_check_branch
      %72 = sbr.rel (0) target = $region41
    $region40: #{audio_classifier_forward.1} parent=1 // pred_region
      %74 = vsyncadd [#allocation9], 0
      %s75 = sshll.u32 %s9, 4
      %s76 = int_to_ptr.hbm [resolvable:$true] %s75
      %s77 = sshll.u32 [#allocation8], 4
      %s78 = int_to_ptr.vmem [resolvable:$true] %s77
      %83 = dma.hbm_to_vmem [thread:$0]  %s76, 512, %s78, [#allocation9], 64, 64, 4
    $region41: #{audio_classifier_forward.1} parent=1 // pred_fallthru
      _
    // Predicated region
    $region42: #{audio_classifier_forward.1} parent=1 // pred_check
      _
    $region43: #{audio_classifier_forward.1} parent=1 // pred_check_branch
      %85 = sbr.rel (0) target = $region45
    $region44: #{audio_classifier_forward.1} parent=1 // pred_region
      %87 = vsyncadd [#allocation9], 0
      %s89 = sshll.u32 %s10, 4
      %s90 = int_to_ptr.hbm [resolvable:$true] %s89
      %s91 = sshll.u32 [#allocation10], 4
      %s92 = int_to_ptr.vmem [resolvable:$true] %s91
      %94 = dma.hbm_to_vmem [thread:$0]  %s90, 16, %s92, [#allocation9]
    $region45: #{audio_classifier_forward.1} parent=1 // pred_fallthru
      _
    // Predicated region
    $region46: #{audio_classifier_forward.1} parent=1 // pred_check
      _
    $region47: #{audio_classifier_forward.1} parent=1 // pred_check_branch
      %96 = sbr.rel (0) target = $region49
    $region48: #{audio_classifier_forward.1} parent=1 // pred_region
      %98 = dma.done [#allocation3], 8192
    $region49: #{audio_classifier_forward.1} parent=1 // pred_fallthru
      _
    // Predicated region
    $region50: #{audio_classifier_forward.1} parent=1 // pred_check
      _
    $region51: #{audio_classifier_forward.1} parent=1 // pred_check_branch
      %100 = sbr.rel (0) target = $region53
    $region52: #{audio_classifier_forward.1} parent=1 // pred_region
      %102 = dma.done [#allocation6], 96
    $region53: #{audio_classifier_forward.1} parent=1 // pred_fallthru
      _
    // Predicated region
    $region54: #{audio_classifier_forward.1} parent=1 // pred_check
      _
    $region55: #{audio_classifier_forward.1} parent=1 // pred_check_branch
      %104 = sbr.rel (0) target = $region57
    $region56: #{audio_classifier_forward.1} parent=1 // pred_region
      %106 = dma.done [#allocation6], 48
    $region57: #{audio_classifier_forward.1} parent=1 // pred_fallthru
      _
    // Predicated region
    $region58: #{audio_classifier_forward.1} parent=1 // pred_check
      _
    $region59: #{audio_classifier_forward.1} parent=1 // pred_check_branch
      %108 = sbr.rel (0) target = $region61
    $region60: #{audio_classifier_forward.1} parent=1 // pred_region
      %110 = dma.done [#allocation9], 512
    $region61: #{audio_classifier_forward.1} parent=1 // pred_fallthru
      _
    // Predicated region
    $region62: #{audio_classifier_forward.1} parent=1 // pred_check
      _
    $region63: #{audio_classifier_forward.1} parent=1 // pred_check_branch
      %112 = sbr.rel (0) target = $region65
    $region64: #{audio_classifier_forward.1} parent=1 // pred_region
      %114 = dma.done [#allocation9], 16
    $region65: #{audio_classifier_forward.1} parent=1 // pred_fallthru
      _
    %v116 = vld [vmem:[%s0] sm:$0xff]
    %118 = vst [vmem:[#allocation1] ss:$4 sm:$0xff] %v116
    %v119 = vld.sshfl [vmem:[#allocation1] sm:$0xff pattern:$0x73625140]
    %v120 = vld.sshfl [vmem:[#allocation1 + $0x8] sm:$0xff pattern:$0x73625140]
    %v121 = vld.sshfl [vmem:[#allocation1 + $0x10] sm:$0xff pattern:$0x73625140]
    %v122 = vld.sshfl [vmem:[#allocation1 + $0x18] sm:$0xff pattern:$0x73625140]
    %v127 = vpack.c.bf16 %v119, %v119
    %v128 = vpack.c.bf16 %v120, %v120
    %v129 = vpack.c.bf16 %v121, %v121
    %v130 = vpack.c.bf16 %v122, %v122
    %v131 = vld [vmem:[%s1] sm:$0xff]
    %v132 = vld [vmem:[%s1 + $0x8] sm:$0xff]
    %v133 = vld [vmem:[%s1 + $0x10] sm:$0xff]
    %v134 = vld [vmem:[%s1 + $0x18] sm:$0xff]
    %v135 = vld [vmem:[%s1 + $0x20] sm:$0xff]
    %v136 = vld [vmem:[%s1 + $0x28] sm:$0xff]
    %v137 = vld [vmem:[%s1 + $0x30] sm:$0xff]
    %v138 = vld [vmem:[%s1 + $0x38] sm:$0xff]
    %v139 = vld [vmem:[%s1 + $0x40] sm:$0xff]
    %v140 = vld [vmem:[%s1 + $0x48] sm:$0xff]
    %v141 = vld [vmem:[%s1 + $0x50] sm:$0xff]
    %v142 = vld [vmem:[%s1 + $0x58] sm:$0xff]
    %v143 = vld [vmem:[%s1 + $0x60] sm:$0xff]
    %v144 = vld [vmem:[%s1 + $0x68] sm:$0xff]
    %v145 = vld [vmem:[%s1 + $0x70] sm:$0xff]
    %v146 = vld [vmem:[%s1 + $0x78] sm:$0xff]
    %v147 = vld [vmem:[%s1 + $0x80] sm:$0xff]
    %v148 = vld [vmem:[%s1 + $0x88] sm:$0xff]
    %v149 = vld [vmem:[%s1 + $0x90] sm:$0xff]
    %v150 = vld [vmem:[%s1 + $0x98] sm:$0xff]
    %v151 = vld [vmem:[%s1 + $0xa0] sm:$0xff]
    %v152 = vld [vmem:[%s1 + $0xa8] sm:$0xff]
    %v153 = vld [vmem:[%s1 + $0xb0] sm:$0xff]
    %v154 = vld [vmem:[%s1 + $0xb8] sm:$0xff]
    %v155 = vld [vmem:[%s1 + $0xc0] sm:$0xff]
    %v156 = vld [vmem:[%s1 + $0xc8] sm:$0xff]
    %v157 = vld [vmem:[%s1 + $0xd0] sm:$0xff]
    %v158 = vld [vmem:[%s1 + $0xd8] sm:$0xff]
    %v159 = vld [vmem:[%s1 + $0xe0] sm:$0xff]
    %v160 = vld [vmem:[%s1 + $0xe8] sm:$0xff]
    %v161 = vld [vmem:[%s1 + $0xf0] sm:$0xff]
    %v162 = vld [vmem:[%s1 + $0xf8] sm:$0xff]
    %v163 = vld [vmem:[%s1 + $0x100] sm:$0xff]
    %v164 = vld [vmem:[%s1 + $0x108] sm:$0xff]
    %v165 = vld [vmem:[%s1 + $0x110] sm:$0xff]
    %v166 = vld [vmem:[%s1 + $0x118] sm:$0xff]
    %v167 = vld [vmem:[%s1 + $0x120] sm:$0xff]
    %v168 = vld [vmem:[%s1 + $0x128] sm:$0xff]
    %v169 = vld [vmem:[%s1 + $0x130] sm:$0xff]
    %v170 = vld [vmem:[%s1 + $0x138] sm:$0xff]
    %v171 = vld [vmem:[%s1 + $0x140] sm:$0xff]
    %v172 = vld [vmem:[%s1 + $0x148] sm:$0xff]
    %v173 = vld [vmem:[%s1 + $0x150] sm:$0xff]
    %v174 = vld [vmem:[%s1 + $0x158] sm:$0xff]
    %v175 = vld [vmem:[%s1 + $0x160] sm:$0xff]
    %v176 = vld [vmem:[%s1 + $0x168] sm:$0xff]
    %v177 = vld [vmem:[%s1 + $0x170] sm:$0xff]
    %v178 = vld [vmem:[%s1 + $0x178] sm:$0xff]
    %v179 = vld [vmem:[%s1 + $0x180] sm:$0xff]
    %v180 = vld [vmem:[%s1 + $0x188] sm:$0xff]
    %v181 = vld [vmem:[%s1 + $0x190] sm:$0xff]
    %v182 = vld [vmem:[%s1 + $0x198] sm:$0xff]
    %v183 = vld [vmem:[%s1 + $0x1a0] sm:$0xff]
    %v184 = vld [vmem:[%s1 + $0x1a8] sm:$0xff]
    %v185 = vld [vmem:[%s1 + $0x1b0] sm:$0xff]
    %v186 = vld [vmem:[%s1 + $0x1b8] sm:$0xff]
    %v187 = vld [vmem:[%s1 + $0x1c0] sm:$0xff]
    %v188 = vld [vmem:[%s1 + $0x1c8] sm:$0xff]
    %v189 = vld [vmem:[%s1 + $0x1d0] sm:$0xff]
    %v190 = vld [vmem:[%s1 + $0x1d8] sm:$0xff]
    %v191 = vld [vmem:[%s1 + $0x1e0] sm:$0xff]
    %v192 = vld [vmem:[%s1 + $0x1e8] sm:$0xff]
    %v193 = vld [vmem:[%s1 + $0x1f0] sm:$0xff]
    %v194 = vld [vmem:[%s1 + $0x1f8] sm:$0xff]
    %v195 = vld [vmem:[%s1 + $0x200] sm:$0xff]
    %v196 = vld [vmem:[%s1 + $0x208] sm:$0xff]
    %v197 = vld [vmem:[%s1 + $0x210] sm:$0xff]
    %v198 = vld [vmem:[%s1 + $0x218] sm:$0xff]
    %v199 = vld [vmem:[%s1 + $0x220] sm:$0xff]
    %v200 = vld [vmem:[%s1 + $0x228] sm:$0xff]
    %v201 = vld [vmem:[%s1 + $0x230] sm:$0xff]
    %v202 = vld [vmem:[%s1 + $0x238] sm:$0xff]
    %v203 = vld [vmem:[%s1 + $0x240] sm:$0xff]
    %v204 = vld [vmem:[%s1 + $0x248] sm:$0xff]
    %v205 = vld [vmem:[%s1 + $0x250] sm:$0xff]
    %v206 = vld [vmem:[%s1 + $0x258] sm:$0xff]
    %v207 = vld [vmem:[%s1 + $0x260] sm:$0xff]
    %v208 = vld [vmem:[%s1 + $0x268] sm:$0xff]
    %v209 = vld [vmem:[%s1 + $0x270] sm:$0xff]
    %v210 = vld [vmem:[%s1 + $0x278] sm:$0xff]
    %v211 = vld [vmem:[%s1 + $0x280] sm:$0xff]
    %v212 = vld [vmem:[%s1 + $0x288] sm:$0xff]
    %v213 = vld [vmem:[%s1 + $0x290] sm:$0xff]
    %v214 = vld [vmem:[%s1 + $0x298] sm:$0xff]
    %v215 = vld [vmem:[%s1 + $0x2a0] sm:$0xff]
    %v216 = vld [vmem:[%s1 + $0x2a8] sm:$0xff]
    %v217 = vld [vmem:[%s1 + $0x2b0] sm:$0xff]
    %v218 = vld [vmem:[%s1 + $0x2b8] sm:$0xff]
    %v219 = vld [vmem:[%s1 + $0x2c0] sm:$0xff]
    %v220 = vld [vmem:[%s1 + $0x2c8] sm:$0xff]
    %v221 = vld [vmem:[%s1 + $0x2d0] sm:$0xff]
    %v222 = vld [vmem:[%s1 + $0x2d8] sm:$0xff]
    %v223 = vld [vmem:[%s1 + $0x2e0] sm:$0xff]
    %v224 = vld [vmem:[%s1 + $0x2e8] sm:$0xff]
    %v225 = vld [vmem:[%s1 + $0x2f0] sm:$0xff]
    %v226 = vld [vmem:[%s1 + $0x2f8] sm:$0xff]
    %v227 = vld [vmem:[%s1 + $0x300] sm:$0xff]
    %v228 = vld [vmem:[%s1 + $0x308] sm:$0xff]
    %v229 = vld [vmem:[%s1 + $0x310] sm:$0xff]
    %v230 = vld [vmem:[%s1 + $0x318] sm:$0xff]
    %v231 = vld [vmem:[%s1 + $0x320] sm:$0xff]
    %v232 = vld [vmem:[%s1 + $0x328] sm:$0xff]
    %v233 = vld [vmem:[%s1 + $0x330] sm:$0xff]
    %v234 = vld [vmem:[%s1 + $0x338] sm:$0xff]
    %v235 = vld [vmem:[%s1 + $0x340] sm:$0xff]
    %v236 = vld [vmem:[%s1 + $0x348] sm:$0xff]
    %v237 = vld [vmem:[%s1 + $0x350] sm:$0xff]
    %v238 = vld [vmem:[%s1 + $0x358] sm:$0xff]
    %v239 = vld [vmem:[%s1 + $0x360] sm:$0xff]
    %v240 = vld [vmem:[%s1 + $0x368] sm:$0xff]
    %v241 = vld [vmem:[%s1 + $0x370] sm:$0xff]
    %v242 = vld [vmem:[%s1 + $0x378] sm:$0xff]
    %v243 = vld [vmem:[%s1 + $0x380] sm:$0xff]
    %v244 = vld [vmem:[%s1 + $0x388] sm:$0xff]
    %v245 = vld [vmem:[%s1 + $0x390] sm:$0xff]
    %v246 = vld [vmem:[%s1 + $0x398] sm:$0xff]
    %v247 = vld [vmem:[%s1 + $0x3a0] sm:$0xff]
    %v248 = vld [vmem:[%s1 + $0x3a8] sm:$0xff]
    %v249 = vld [vmem:[%s1 + $0x3b0] sm:$0xff]
    %v250 = vld [vmem:[%s1 + $0x3b8] sm:$0xff]
    %v251 = vld [vmem:[%s1 + $0x3c0] sm:$0xff]
    %v252 = vld [vmem:[%s1 + $0x3c8] sm:$0xff]
    %v253 = vld [vmem:[%s1 + $0x3d0] sm:$0xff]
    %v254 = vld [vmem:[%s1 + $0x3d8] sm:$0xff]
    %v255 = vld [vmem:[%s1 + $0x3e0] sm:$0xff]
    %v256 = vld [vmem:[%s1 + $0x3e8] sm:$0xff]
    %v257 = vld [vmem:[%s1 + $0x3f0] sm:$0xff]
    %v258 = vld [vmem:[%s1 + $0x3f8] sm:$0xff]
    %v259 = vld [vmem:[%s2] sm:$0xf]
    %v261 = vperm.slane %v259, 0
    %v262 = vperm.slane %v259, 1
    %v263 = vperm.slane %v259, 2
    %v264 = vperm.slane %v259, 3
    %v397 = vunpack.c.l.b16 %v131
    %v398 = vunpack.c.h.b16 %v131
    %v399 = vunpack.c.l.b16 %v132
    %v400 = vunpack.c.h.b16 %v132
    %v401 = vunpack.c.l.b16 %v133
    %v402 = vunpack.c.h.b16 %v133
    %v403 = vunpack.c.l.b16 %v134
    %v404 = vunpack.c.h.b16 %v134
    %v405 = vunpack.c.l.b16 %v135
    %v406 = vunpack.c.h.b16 %v135
    %v407 = vunpack.c.l.b16 %v136
    %v408 = vunpack.c.h.b16 %v136
    %v409 = vunpack.c.l.b16 %v137
    %v410 = vunpack.c.h.b16 %v137
    %v411 = vunpack.c.l.b16 %v138
    %v412 = vunpack.c.h.b16 %v138
    %v413 = vunpack.c.l.b16 %v139
    %v414 = vunpack.c.h.b16 %v139
    %v415 = vunpack.c.l.b16 %v140
    %v416 = vunpack.c.h.b16 %v140
    %v417 = vunpack.c.l.b16 %v141
    %v418 = vunpack.c.h.b16 %v141
    %v419 = vunpack.c.l.b16 %v142
    %v420 = vunpack.c.h.b16 %v142
    %v421 = vunpack.c.l.b16 %v143
    %v422 = vunpack.c.h.b16 %v143
    %v423 = vunpack.c.l.b16 %v144
    %v424 = vunpack.c.h.b16 %v144
    %v425 = vunpack.c.l.b16 %v145
    %v426 = vunpack.c.h.b16 %v145
    %v427 = vunpack.c.l.b16 %v146
    %v428 = vunpack.c.h.b16 %v146
    %v429 = vunpack.c.l.b16 %v147
    %v430 = vunpack.c.h.b16 %v147
    %v431 = vunpack.c.l.b16 %v148
    %v432 = vunpack.c.h.b16 %v148
    %v433 = vunpack.c.l.b16 %v149
    %v434 = vunpack.c.h.b16 %v149
    %v435 = vunpack.c.l.b16 %v150
    %v436 = vunpack.c.h.b16 %v150
    %v437 = vunpack.c.l.b16 %v151
    %v438 = vunpack.c.h.b16 %v151
    %v439 = vunpack.c.l.b16 %v152
    %v440 = vunpack.c.h.b16 %v152
    %v441 = vunpack.c.l.b16 %v153
    %v442 = vunpack.c.h.b16 %v153
    %v443 = vunpack.c.l.b16 %v154
    %v444 = vunpack.c.h.b16 %v154
    %v445 = vunpack.c.l.b16 %v155
    %v446 = vunpack.c.h.b16 %v155
    %v447 = vunpack.c.l.b16 %v156
    %v448 = vunpack.c.h.b16 %v156
    %v449 = vunpack.c.l.b16 %v157
    %v450 = vunpack.c.h.b16 %v157
    %v451 = vunpack.c.l.b16 %v158
    %v452 = vunpack.c.h.b16 %v158
    %v453 = vunpack.c.l.b16 %v159
    %v454 = vunpack.c.h.b16 %v159
    %v455 = vunpack.c.l.b16 %v160
    %v456 = vunpack.c.h.b16 %v160
    %v457 = vunpack.c.l.b16 %v161
    %v458 = vunpack.c.h.b16 %v161
    %v459 = vunpack.c.l.b16 %v162
    %v460 = vunpack.c.h.b16 %v162
    %v461 = vunpack.c.l.b16 %v163
    %v462 = vunpack.c.h.b16 %v163
    %v463 = vunpack.c.l.b16 %v164
    %v464 = vunpack.c.h.b16 %v164
    %v465 = vunpack.c.l.b16 %v165
    %v466 = vunpack.c.h.b16 %v165
    %v467 = vunpack.c.l.b16 %v166
    %v468 = vunpack.c.h.b16 %v166
    %v469 = vunpack.c.l.b16 %v167
    %v470 = vunpack.c.h.b16 %v167
    %v471 = vunpack.c.l.b16 %v168
    %v472 = vunpack.c.h.b16 %v168
    %v473 = vunpack.c.l.b16 %v169
    %v474 = vunpack.c.h.b16 %v169
    %v475 = vunpack.c.l.b16 %v170
    %v476 = vunpack.c.h.b16 %v170
    %v477 = vunpack.c.l.b16 %v171
    %v478 = vunpack.c.h.b16 %v171
    %v479 = vunpack.c.l.b16 %v172
    %v480 = vunpack.c.h.b16 %v172
    %v481 = vunpack.c.l.b16 %v173
    %v482 = vunpack.c.h.b16 %v173
    %v483 = vunpack.c.l.b16 %v174
    %v484 = vunpack.c.h.b16 %v174
    %v485 = vunpack.c.l.b16 %v175
    %v486 = vunpack.c.h.b16 %v175
    %v487 = vunpack.c.l.b16 %v176
    %v488 = vunpack.c.h.b16 %v176
    %v489 = vunpack.c.l.b16 %v177
    %v490 = vunpack.c.h.b16 %v177
    %v491 = vunpack.c.l.b16 %v178
    %v492 = vunpack.c.h.b16 %v178
    %v493 = vunpack.c.l.b16 %v179
    %v494 = vunpack.c.h.b16 %v179
    %v495 = vunpack.c.l.b16 %v180
    %v496 = vunpack.c.h.b16 %v180
    %v497 = vunpack.c.l.b16 %v181
    %v498 = vunpack.c.h.b16 %v181
    %v499 = vunpack.c.l.b16 %v182
    %v500 = vunpack.c.h.b16 %v182
    %v501 = vunpack.c.l.b16 %v183
    %v502 = vunpack.c.h.b16 %v183
    %v503 = vunpack.c.l.b16 %v184
    %v504 = vunpack.c.h.b16 %v184
    %v505 = vunpack.c.l.b16 %v185
    %v506 = vunpack.c.h.b16 %v185
    %v507 = vunpack.c.l.b16 %v186
    %v508 = vunpack.c.h.b16 %v186
    %v509 = vunpack.c.l.b16 %v187
    %v510 = vunpack.c.h.b16 %v187
    %v511 = vunpack.c.l.b16 %v188
    %v512 = vunpack.c.h.b16 %v188
    %v513 = vunpack.c.l.b16 %v189
    %v514 = vunpack.c.h.b16 %v189
    %v515 = vunpack.c.l.b16 %v190
    %v516 = vunpack.c.h.b16 %v190
    %v517 = vunpack.c.l.b16 %v191
    %v518 = vunpack.c.h.b16 %v191
    %v519 = vunpack.c.l.b16 %v192
    %v520 = vunpack.c.h.b16 %v192
    %v521 = vunpack.c.l.b16 %v193
    %v522 = vunpack.c.h.b16 %v193
    %v523 = vunpack.c.l.b16 %v194
    %v524 = vunpack.c.h.b16 %v194
    %v525 = vunpack.c.l.b16 %v195
    %v526 = vunpack.c.h.b16 %v195
    %v527 = vunpack.c.l.b16 %v196
    %v528 = vunpack.c.h.b16 %v196
    %v529 = vunpack.c.l.b16 %v197
    %v530 = vunpack.c.h.b16 %v197
    %v531 = vunpack.c.l.b16 %v198
    %v532 = vunpack.c.h.b16 %v198
    %v533 = vunpack.c.l.b16 %v199
    %v534 = vunpack.c.h.b16 %v199
    %v535 = vunpack.c.l.b16 %v200
    %v536 = vunpack.c.h.b16 %v200
    %v537 = vunpack.c.l.b16 %v201
    %v538 = vunpack.c.h.b16 %v201
    %v539 = vunpack.c.l.b16 %v202
    %v540 = vunpack.c.h.b16 %v202
    %v541 = vunpack.c.l.b16 %v203
    %v542 = vunpack.c.h.b16 %v203
    %v543 = vunpack.c.l.b16 %v204
    %v544 = vunpack.c.h.b16 %v204
    %v545 = vunpack.c.l.b16 %v205
    %v546 = vunpack.c.h.b16 %v205
    %v547 = vunpack.c.l.b16 %v206
    %v548 = vunpack.c.h.b16 %v206
    %v549 = vunpack.c.l.b16 %v207
    %v550 = vunpack.c.h.b16 %v207
    %v551 = vunpack.c.l.b16 %v208
    %v552 = vunpack.c.h.b16 %v208
    %v553 = vunpack.c.l.b16 %v209
    %v554 = vunpack.c.h.b16 %v209
    %v555 = vunpack.c.l.b16 %v210
    %v556 = vunpack.c.h.b16 %v210
    %v557 = vunpack.c.l.b16 %v211
    %v558 = vunpack.c.h.b16 %v211
    %v559 = vunpack.c.l.b16 %v212
    %v560 = vunpack.c.h.b16 %v212
    %v561 = vunpack.c.l.b16 %v213
    %v562 = vunpack.c.h.b16 %v213
    %v563 = vunpack.c.l.b16 %v214
    %v564 = vunpack.c.h.b16 %v214
    %v565 = vunpack.c.l.b16 %v215
    %v566 = vunpack.c.h.b16 %v215
    %v567 = vunpack.c.l.b16 %v216
    %v568 = vunpack.c.h.b16 %v216
    %v569 = vunpack.c.l.b16 %v217
    %v570 = vunpack.c.h.b16 %v217
    %v571 = vunpack.c.l.b16 %v218
    %v572 = vunpack.c.h.b16 %v218
    %v573 = vunpack.c.l.b16 %v219
    %v574 = vunpack.c.h.b16 %v219
    %v575 = vunpack.c.l.b16 %v220
    %v576 = vunpack.c.h.b16 %v220
    %v577 = vunpack.c.l.b16 %v221
    %v578 = vunpack.c.h.b16 %v221
    %v579 = vunpack.c.l.b16 %v222
    %v580 = vunpack.c.h.b16 %v222
    %v581 = vunpack.c.l.b16 %v223
    %v582 = vunpack.c.h.b16 %v223
    %v583 = vunpack.c.l.b16 %v224
    %v584 = vunpack.c.h.b16 %v224
    %v585 = vunpack.c.l.b16 %v225
    %v586 = vunpack.c.h.b16 %v225
    %v587 = vunpack.c.l.b16 %v226
    %v588 = vunpack.c.h.b16 %v226
    %v589 = vunpack.c.l.b16 %v227
    %v590 = vunpack.c.h.b16 %v227
    %v591 = vunpack.c.l.b16 %v228
    %v592 = vunpack.c.h.b16 %v228
    %v593 = vunpack.c.l.b16 %v229
    %v594 = vunpack.c.h.b16 %v229
    %v595 = vunpack.c.l.b16 %v230
    %v596 = vunpack.c.h.b16 %v230
    %v597 = vunpack.c.l.b16 %v231
    %v598 = vunpack.c.h.b16 %v231
    %v599 = vunpack.c.l.b16 %v232
    %v600 = vunpack.c.h.b16 %v232
    %v601 = vunpack.c.l.b16 %v233
    %v602 = vunpack.c.h.b16 %v233
    %v603 = vunpack.c.l.b16 %v234
    %v604 = vunpack.c.h.b16 %v234
    %v605 = vunpack.c.l.b16 %v235
    %v606 = vunpack.c.h.b16 %v235
    %v607 = vunpack.c.l.b16 %v236
    %v608 = vunpack.c.h.b16 %v236
    %v609 = vunpack.c.l.b16 %v237
    %v610 = vunpack.c.h.b16 %v237
    %v611 = vunpack.c.l.b16 %v238
    %v612 = vunpack.c.h.b16 %v238
    %v613 = vunpack.c.l.b16 %v239
    %v614 = vunpack.c.h.b16 %v239
    %v615 = vunpack.c.l.b16 %v240
    %v616 = vunpack.c.h.b16 %v240
    %v617 = vunpack.c.l.b16 %v241
    %v618 = vunpack.c.h.b16 %v241
    %v619 = vunpack.c.l.b16 %v242
    %v620 = vunpack.c.h.b16 %v242
    %v621 = vunpack.c.l.b16 %v243
    %v622 = vunpack.c.h.b16 %v243
    %v623 = vunpack.c.l.b16 %v244
    %v624 = vunpack.c.h.b16 %v244
    %v625 = vunpack.c.l.b16 %v245
    %v626 = vunpack.c.h.b16 %v245
    %v627 = vunpack.c.l.b16 %v246
    %v628 = vunpack.c.h.b16 %v246
    %v629 = vunpack.c.l.b16 %v247
    %v630 = vunpack.c.h.b16 %v247
    %v631 = vunpack.c.l.b16 %v248
    %v632 = vunpack.c.h.b16 %v248
    %v633 = vunpack.c.l.b16 %v249
    %v634 = vunpack.c.h.b16 %v249
    %v635 = vunpack.c.l.b16 %v250
    %v636 = vunpack.c.h.b16 %v250
    %v637 = vunpack.c.l.b16 %v251
    %v638 = vunpack.c.h.b16 %v251
    %v639 = vunpack.c.l.b16 %v252
    %v640 = vunpack.c.h.b16 %v252
    %v641 = vunpack.c.l.b16 %v253
    %v642 = vunpack.c.h.b16 %v253
    %v643 = vunpack.c.l.b16 %v254
    %v644 = vunpack.c.h.b16 %v254
    %v645 = vunpack.c.l.b16 %v255
    %v646 = vunpack.c.h.b16 %v255
    %v647 = vunpack.c.l.b16 %v256
    %v648 = vunpack.c.h.b16 %v256
    %v649 = vunpack.c.l.b16 %v257
    %v650 = vunpack.c.h.b16 %v257
    %v651 = vunpack.c.l.b16 %v258
    %v652 = vunpack.c.h.b16 %v258
    %v653 = vpack.c.b16 %v401, %v397
    %v654 = vpack.c.b16 %v402, %v398
    %v655 = vpack.c.b16 %v403, %v399
    %v656 = vpack.c.b16 %v404, %v400
    %v657 = vpack.c.b16 %v409, %v405
    %v658 = vpack.c.b16 %v410, %v406
    %v659 = vpack.c.b16 %v411, %v407
    %v660 = vpack.c.b16 %v412, %v408
    %v661 = vpack.c.b16 %v417, %v413
    %v662 = vpack.c.b16 %v418, %v414
    %v663 = vpack.c.b16 %v419, %v415
    %v664 = vpack.c.b16 %v420, %v416
    %v665 = vpack.c.b16 %v425, %v421
    %v666 = vpack.c.b16 %v426, %v422
    %v667 = vpack.c.b16 %v427, %v423
    %v668 = vpack.c.b16 %v428, %v424
    %v669 = vpack.c.b16 %v433, %v429
    %v670 = vpack.c.b16 %v434, %v430
    %v671 = vpack.c.b16 %v435, %v431
    %v672 = vpack.c.b16 %v436, %v432
    %v673 = vpack.c.b16 %v441, %v437
    %v674 = vpack.c.b16 %v442, %v438
    %v675 = vpack.c.b16 %v443, %v439
    %v676 = vpack.c.b16 %v444, %v440
    %v677 = vpack.c.b16 %v449, %v445
    %v678 = vpack.c.b16 %v450, %v446
    %v679 = vpack.c.b16 %v451, %v447
    %v680 = vpack.c.b16 %v452, %v448
    %v681 = vpack.c.b16 %v457, %v453
    %v682 = vpack.c.b16 %v458, %v454
    %v683 = vpack.c.b16 %v459, %v455
    %v684 = vpack.c.b16 %v460, %v456
    %v685 = vpack.c.b16 %v465, %v461
    %v686 = vpack.c.b16 %v466, %v462
    %v687 = vpack.c.b16 %v467, %v463
    %v688 = vpack.c.b16 %v468, %v464
    %v689 = vpack.c.b16 %v473, %v469
    %v690 = vpack.c.b16 %v474, %v470
    %v691 = vpack.c.b16 %v475, %v471
    %v692 = vpack.c.b16 %v476, %v472
    %v693 = vpack.c.b16 %v481, %v477
    %v694 = vpack.c.b16 %v482, %v478
    %v695 = vpack.c.b16 %v483, %v479
    %v696 = vpack.c.b16 %v484, %v480
    %v697 = vpack.c.b16 %v489, %v485
    %v698 = vpack.c.b16 %v490, %v486
    %v699 = vpack.c.b16 %v491, %v487
    %v700 = vpack.c.b16 %v492, %v488
    %v701 = vpack.c.b16 %v497, %v493
    %v702 = vpack.c.b16 %v498, %v494
    %v703 = vpack.c.b16 %v499, %v495
    %v704 = vpack.c.b16 %v500, %v496
    %v705 = vpack.c.b16 %v505, %v501
    %v706 = vpack.c.b16 %v506, %v502
    %v707 = vpack.c.b16 %v507, %v503
    %v708 = vpack.c.b16 %v508, %v504
    %v709 = vpack.c.b16 %v513, %v509
    %v710 = vpack.c.b16 %v514, %v510
    %v711 = vpack.c.b16 %v515, %v511
    %v712 = vpack.c.b16 %v516, %v512
    %v713 = vpack.c.b16 %v521, %v517
    %v714 = vpack.c.b16 %v522, %v518
    %v715 = vpack.c.b16 %v523, %v519
    %v716 = vpack.c.b16 %v524, %v520
    %v717 = vpack.c.b16 %v529, %v525
    %v718 = vpack.c.b16 %v530, %v526
    %v719 = vpack.c.b16 %v531, %v527
    %v720 = vpack.c.b16 %v532, %v528
    %v721 = vpack.c.b16 %v537, %v533
    %v722 = vpack.c.b16 %v538, %v534
    %v723 = vpack.c.b16 %v539, %v535
    %v724 = vpack.c.b16 %v540, %v536
    %v725 = vpack.c.b16 %v545, %v541
    %v726 = vpack.c.b16 %v546, %v542
    %v727 = vpack.c.b16 %v547, %v543
    %v728 = vpack.c.b16 %v548, %v544
    %v729 = vpack.c.b16 %v553, %v549
    %v730 = vpack.c.b16 %v554, %v550
    %v731 = vpack.c.b16 %v555, %v551
    %v732 = vpack.c.b16 %v556, %v552
    %v733 = vpack.c.b16 %v561, %v557
    %v734 = vpack.c.b16 %v562, %v558
    %v735 = vpack.c.b16 %v563, %v559
    %v736 = vpack.c.b16 %v564, %v560
    %v737 = vpack.c.b16 %v569, %v565
    %v738 = vpack.c.b16 %v570, %v566
    %v739 = vpack.c.b16 %v571, %v567
    %v740 = vpack.c.b16 %v572, %v568
    %v741 = vpack.c.b16 %v577, %v573
    %v742 = vpack.c.b16 %v578, %v574
    %v743 = vpack.c.b16 %v579, %v575
    %v744 = vpack.c.b16 %v580, %v576
    %v745 = vpack.c.b16 %v585, %v581
    %v746 = vpack.c.b16 %v586, %v582
    %v747 = vpack.c.b16 %v587, %v583
    %v748 = vpack.c.b16 %v588, %v584
    %v749 = vpack.c.b16 %v593, %v589
    %v750 = vpack.c.b16 %v594, %v590
    %v751 = vpack.c.b16 %v595, %v591
    %v752 = vpack.c.b16 %v596, %v592
    %v753 = vpack.c.b16 %v601, %v597
    %v754 = vpack.c.b16 %v602, %v598
    %v755 = vpack.c.b16 %v603, %v599
    %v756 = vpack.c.b16 %v604, %v600
    %v757 = vpack.c.b16 %v609, %v605
    %v758 = vpack.c.b16 %v610, %v606
    %v759 = vpack.c.b16 %v611, %v607
    %v760 = vpack.c.b16 %v612, %v608
    %v761 = vpack.c.b16 %v617, %v613
    %v762 = vpack.c.b16 %v618, %v614
    %v763 = vpack.c.b16 %v619, %v615
    %v764 = vpack.c.b16 %v620, %v616
    %v765 = vpack.c.b16 %v625, %v621
    %v766 = vpack.c.b16 %v626, %v622
    %v767 = vpack.c.b16 %v627, %v623
    %v768 = vpack.c.b16 %v628, %v624
    %v769 = vpack.c.b16 %v633, %v629
    %v770 = vpack.c.b16 %v634, %v630
    %v771 = vpack.c.b16 %v635, %v631
    %v772 = vpack.c.b16 %v636, %v632
    %v773 = vpack.c.b16 %v641, %v637
    %v774 = vpack.c.b16 %v642, %v638
    %v775 = vpack.c.b16 %v643, %v639
    %v776 = vpack.c.b16 %v644, %v640
    %v777 = vpack.c.b16 %v649, %v645
    %v778 = vpack.c.b16 %v650, %v646
    %v779 = vpack.c.b16 %v651, %v647
    %v780 = vpack.c.b16 %v652, %v648
    %909 = vmatpush.bf16.msra.mxu0 %v681
    %910 = vmatpush.bf16.msra.mxu0 %v677
    %911 = vmatpush.bf16.msra.mxu0 %v673
    %912 = vmatpush.bf16.msra.mxu0 %v669
    %913 = vmatpush.bf16.msra.mxu0 %v665
    %914 = vmatpush.bf16.msra.mxu0 %v661
    %915 = vmatpush.bf16.msra.mxu0 %v657
    %916 = vmatpush.bf16.msra.mxu0 %v653
    %917 = vmatmul.bf16.gmra.mxu0 %v127
    %v918 = vpop.f32.mrf.mxu0
    %v919 = vadd.f32 %v261, %v918
    %v920 = vpop.f32.mrf.mxu0
    %921 = vdwg.mxu0
    %922 = vmatpush.bf16.msra.mxu0 %v713
    %923 = vmatpush.bf16.msra.mxu0 %v709
    %924 = vmatpush.bf16.msra.mxu0 %v705
    %925 = vmatpush.bf16.msra.mxu0 %v701
    %926 = vmatpush.bf16.msra.mxu0 %v697
    %927 = vmatpush.bf16.msra.mxu0 %v693
    %928 = vmatpush.bf16.msra.mxu0 %v689
    %929 = vmatpush.bf16.msra.mxu0 %v685
    %930 = vmatmul.bf16.gmra.mxu0 %v128
    %v931 = vpop.f32.mrf.mxu0
    %v932 = vadd.f32 %v919, %v931
    %v933 = vpop.f32.mrf.mxu0
    %934 = vdwg.mxu0
    %935 = vmatpush.bf16.msra.mxu0 %v745
    %936 = vmatpush.bf16.msra.mxu0 %v741
    %937 = vmatpush.bf16.msra.mxu0 %v737
    %938 = vmatpush.bf16.msra.mxu0 %v733
    %939 = vmatpush.bf16.msra.mxu0 %v729
    %940 = vmatpush.bf16.msra.mxu0 %v725
    %941 = vmatpush.bf16.msra.mxu0 %v721
    %942 = vmatpush.bf16.msra.mxu0 %v717
    %943 = vmatmul.bf16.gmra.mxu0 %v129
    %v944 = vpop.f32.mrf.mxu0
    %v945 = vadd.f32 %v932, %v944
    %v946 = vpop.f32.mrf.mxu0
    %947 = vdwg.mxu0
    %948 = vmatpush.bf16.msra.mxu0 %v777
    %949 = vmatpush.bf16.msra.mxu0 %v773
    %950 = vmatpush.bf16.msra.mxu0 %v769
    %951 = vmatpush.bf16.msra.mxu0 %v765
    %952 = vmatpush.bf16.msra.mxu0 %v761
    %953 = vmatpush.bf16.msra.mxu0 %v757
    %954 = vmatpush.bf16.msra.mxu0 %v753
    %955 = vmatpush.bf16.msra.mxu0 %v749
    %956 = vmatmul.bf16.gmra.mxu0 %v130
    %v957 = vpop.f32.mrf.mxu0
    %v958 = vadd.f32 %v945, %v957
    %v959 = vpop.f32.mrf.mxu0
    %960 = vdwg.mxu0
    %961 = vmatpush.bf16.msra.mxu0 %v682
    %962 = vmatpush.bf16.msra.mxu0 %v678
    %963 = vmatpush.bf16.msra.mxu0 %v674
    %964 = vmatpush.bf16.msra.mxu0 %v670
    %965 = vmatpush.bf16.msra.mxu0 %v666
    %966 = vmatpush.bf16.msra.mxu0 %v662
    %967 = vmatpush.bf16.msra.mxu0 %v658
    %968 = vmatpush.bf16.msra.mxu0 %v654
    %969 = vmatmul.bf16.gmra.mxu0 %v127
    %v970 = vpop.f32.mrf.mxu0
    %v971 = vadd.f32 %v262, %v970
    %v972 = vpop.f32.mrf.mxu0
    %973 = vdwg.mxu0
    %974 = vmatpush.bf16.msra.mxu0 %v714
    %975 = vmatpush.bf16.msra.mxu0 %v710
    %976 = vmatpush.bf16.msra.mxu0 %v706
    %977 = vmatpush.bf16.msra.mxu0 %v702
    %978 = vmatpush.bf16.msra.mxu0 %v698
    %979 = vmatpush.bf16.msra.mxu0 %v694
    %980 = vmatpush.bf16.msra.mxu0 %v690
    %981 = vmatpush.bf16.msra.mxu0 %v686
    %982 = vmatmul.bf16.gmra.mxu0 %v128
    %v983 = vpop.f32.mrf.mxu0
    %v984 = vadd.f32 %v971, %v983
    %v985 = vpop.f32.mrf.mxu0
    %986 = vdwg.mxu0
    %987 = vmatpush.bf16.msra.mxu0 %v746
    %988 = vmatpush.bf16.msra.mxu0 %v742
    %989 = vmatpush.bf16.msra.mxu0 %v738
    %990 = vmatpush.bf16.msra.mxu0 %v734
    %991 = vmatpush.bf16.msra.mxu0 %v730
    %992 = vmatpush.bf16.msra.mxu0 %v726
    %993 = vmatpush.bf16.msra.mxu0 %v722
    %994 = vmatpush.bf16.msra.mxu0 %v718
    %995 = vmatmul.bf16.gmra.mxu0 %v129
    %v996 = vpop.f32.mrf.mxu0
    %v997 = vadd.f32 %v984, %v996
    %v998 = vpop.f32.mrf.mxu0
    %999 = vdwg.mxu0
    %1000 = vmatpush.bf16.msra.mxu0 %v778
    %1001 = vmatpush.bf16.msra.mxu0 %v774
    %1002 = vmatpush.bf16.msra.mxu0 %v770
    %1003 = vmatpush.bf16.msra.mxu0 %v766
    %1004 = vmatpush.bf16.msra.mxu0 %v762
    %1005 = vmatpush.bf16.msra.mxu0 %v758
    %1006 = vmatpush.bf16.msra.mxu0 %v754
    %1007 = vmatpush.bf16.msra.mxu0 %v750
    %1008 = vmatmul.bf16.gmra.mxu0 %v130
    %v1009 = vpop.f32.mrf.mxu0
    %v1010 = vadd.f32 %v997, %v1009
    %v1011 = vpop.f32.mrf.mxu0
    %1012 = vdwg.mxu0
    %1013 = vmatpush.bf16.msra.mxu0 %v683
    %1014 = vmatpush.bf16.msra.mxu0 %v679
    %1015 = vmatpush.bf16.msra.mxu0 %v675
    %1016 = vmatpush.bf16.msra.mxu0 %v671
    %1017 = vmatpush.bf16.msra.mxu0 %v667
    %1018 = vmatpush.bf16.msra.mxu0 %v663
    %1019 = vmatpush.bf16.msra.mxu0 %v659
    %1020 = vmatpush.bf16.msra.mxu0 %v655
    %1021 = vmatmul.bf16.gmra.mxu0 %v127
    %v1022 = vpop.f32.mrf.mxu0
    %v1023 = vadd.f32 %v263, %v1022
    %v1024 = vpop.f32.mrf.mxu0
    %1025 = vdwg.mxu0
    %1026 = vmatpush.bf16.msra.mxu0 %v715
    %1027 = vmatpush.bf16.msra.mxu0 %v711
    %1028 = vmatpush.bf16.msra.mxu0 %v707
    %1029 = vmatpush.bf16.msra.mxu0 %v703
    %1030 = vmatpush.bf16.msra.mxu0 %v699
    %1031 = vmatpush.bf16.msra.mxu0 %v695
    %1032 = vmatpush.bf16.msra.mxu0 %v691
    %1033 = vmatpush.bf16.msra.mxu0 %v687
    %1034 = vmatmul.bf16.gmra.mxu0 %v128
    %v1035 = vpop.f32.mrf.mxu0
    %v1036 = vadd.f32 %v1023, %v1035
    %v1037 = vpop.f32.mrf.mxu0
    %1038 = vdwg.mxu0
    %1039 = vmatpush.bf16.msra.mxu0 %v747
    %1040 = vmatpush.bf16.msra.mxu0 %v743
    %1041 = vmatpush.bf16.msra.mxu0 %v739
    %1042 = vmatpush.bf16.msra.mxu0 %v735
    %1043 = vmatpush.bf16.msra.mxu0 %v731
    %1044 = vmatpush.bf16.msra.mxu0 %v727
    %1045 = vmatpush.bf16.msra.mxu0 %v723
    %1046 = vmatpush.bf16.msra.mxu0 %v719
    %1047 = vmatmul.bf16.gmra.mxu0 %v129
    %v1048 = vpop.f32.mrf.mxu0
    %v1049 = vadd.f32 %v1036, %v1048
    %v1050 = vpop.f32.mrf.mxu0
    %1051 = vdwg.mxu0
    %1052 = vmatpush.bf16.msra.mxu0 %v779
    %1053 = vmatpush.bf16.msra.mxu0 %v775
    %1054 = vmatpush.bf16.msra.mxu0 %v771
    %1055 = vmatpush.bf16.msra.mxu0 %v767
    %1056 = vmatpush.bf16.msra.mxu0 %v763
    %1057 = vmatpush.bf16.msra.mxu0 %v759
    %1058 = vmatpush.bf16.msra.mxu0 %v755
    %1059 = vmatpush.bf16.msra.mxu0 %v751
    %1060 = vmatmul.bf16.gmra.mxu0 %v130
    %v1061 = vpop.f32.mrf.mxu0
    %v1062 = vadd.f32 %v1049, %v1061
    %v1063 = vpop.f32.mrf.mxu0
    %1064 = vdwg.mxu0
    %1065 = vmatpush.bf16.msra.mxu0 %v684
    %1066 = vmatpush.bf16.msra.mxu0 %v680
    %1067 = vmatpush.bf16.msra.mxu0 %v676
    %1068 = vmatpush.bf16.msra.mxu0 %v672
    %1069 = vmatpush.bf16.msra.mxu0 %v668
    %1070 = vmatpush.bf16.msra.mxu0 %v664
    %1071 = vmatpush.bf16.msra.mxu0 %v660
    %1072 = vmatpush.bf16.msra.mxu0 %v656
    %1073 = vmatmul.bf16.gmra.mxu0 %v127
    %v1074 = vpop.f32.mrf.mxu0
    %v1075 = vadd.f32 %v264, %v1074
    %v1076 = vpop.f32.mrf.mxu0
    %1077 = vdwg.mxu0
    %1078 = vmatpush.bf16.msra.mxu0 %v716
    %1079 = vmatpush.bf16.msra.mxu0 %v712
    %1080 = vmatpush.bf16.msra.mxu0 %v708
    %1081 = vmatpush.bf16.msra.mxu0 %v704
    %1082 = vmatpush.bf16.msra.mxu0 %v700
    %1083 = vmatpush.bf16.msra.mxu0 %v696
    %1084 = vmatpush.bf16.msra.mxu0 %v692
    %1085 = vmatpush.bf16.msra.mxu0 %v688
    %1086 = vmatmul.bf16.gmra.mxu0 %v128
    %v1087 = vpop.f32.mrf.mxu0
    %v1088 = vadd.f32 %v1075, %v1087
    %v1089 = vpop.f32.mrf.mxu0
    %1090 = vdwg.mxu0
    %1091 = vmatpush.bf16.msra.mxu0 %v748
    %1092 = vmatpush.bf16.msra.mxu0 %v744
    %1093 = vmatpush.bf16.msra.mxu0 %v740
    %1094 = vmatpush.bf16.msra.mxu0 %v736
    %1095 = vmatpush.bf16.msra.mxu0 %v732
    %1096 = vmatpush.bf16.msra.mxu0 %v728
    %1097 = vmatpush.bf16.msra.mxu0 %v724
    %1098 = vmatpush.bf16.msra.mxu0 %v720
    %1099 = vmatmul.bf16.gmra.mxu0 %v129
    %v1100 = vpop.f32.mrf.mxu0
    %v1101 = vadd.f32 %v1088, %v1100
    %v1102 = vpop.f32.mrf.mxu0
    %1103 = vdwg.mxu0
    %1104 = vmatpush.bf16.msra.mxu0 %v780
    %1105 = vmatpush.bf16.msra.mxu0 %v776
    %1106 = vmatpush.bf16.msra.mxu0 %v772
    %1107 = vmatpush.bf16.msra.mxu0 %v768
    %1108 = vmatpush.bf16.msra.mxu0 %v764
    %1109 = vmatpush.bf16.msra.mxu0 %v760
    %1110 = vmatpush.bf16.msra.mxu0 %v756
    %1111 = vmatpush.bf16.msra.mxu0 %v752
    %1112 = vmatmul.bf16.gmra.mxu0 %v130
    %v1113 = vpop.f32.mrf.mxu0
    %v1114 = vadd.f32 %v1101, %v1113
    %v1115 = vpop.f32.mrf.mxu0
    %1116 = vdwg.mxu0
    %v1117 = vmax.f32 %v958, 0.0
    %v1118 = vmax.f32 %v1010, 0.0
    %v1119 = vmax.f32 %v1062, 0.0
    %v1120 = vmax.f32 %v1114, 0.0
    %s1121 = scalar_lea.vmem %s2, 4
    %v1122 = vld [vmem:[%s1121] sm:$0xf]
    %v1124 = vperm.slane %v1122, 0
    %v1125 = vperm.slane %v1122, 1
    %v1126 = vperm.slane %v1122, 2
    %v1127 = vperm.slane %v1122, 3
    %v1132 = vmul.f32 %v1117, %v1124
    %v1133 = vmul.f32 %v1118, %v1125
    %v1134 = vmul.f32 %v1119, %v1126
    %v1135 = vmul.f32 %v1120, %v1127
    %s1136 = scalar_lea.vmem %s2, 8
    %v1137 = vld [vmem:[%s1136] sm:$0xf]
    %v1139 = vperm.slane %v1137, 0
    %v1140 = vperm.slane %v1137, 1
    %v1141 = vperm.slane %v1137, 2
    %v1142 = vperm.slane %v1137, 3
    %v1147 = vadd.f32 %v1132, %v1139
    %v1148 = vadd.f32 %v1133, %v1140
    %v1149 = vadd.f32 %v1134, %v1141
    %v1150 = vadd.f32 %v1135, %v1142
    %v1151 = vpack.c.bf16 %v1147, %v1147
    %v1152 = vpack.c.bf16 %v1148, %v1148
    %v1153 = vpack.c.bf16 %v1149, %v1149
    %v1154 = vpack.c.bf16 %v1150, %v1150
    %v1155 = vld [vmem:[#allocation2] sm:$0xff]
    %v1156 = vld [vmem:[#allocation2 + $0x8] sm:$0xff]
    %v1157 = vld [vmem:[#allocation2 + $0x10] sm:$0xff]
    %v1158 = vld [vmem:[#allocation2 + $0x18] sm:$0xff]
    %v1159 = vld [vmem:[#allocation2 + $0x20] sm:$0xff]
    %v1160 = vld [vmem:[#allocation2 + $0x28] sm:$0xff]
    %v1161 = vld [vmem:[#allocation2 + $0x30] sm:$0xff]
    %v1162 = vld [vmem:[#allocation2 + $0x38] sm:$0xff]
    %v1163 = vld [vmem:[#allocation2 + $0x40] sm:$0xff]
    %v1164 = vld [vmem:[#allocation2 + $0x48] sm:$0xff]
    %v1165 = vld [vmem:[#allocation2 + $0x50] sm:$0xff]
    %v1166 = vld [vmem:[#allocation2 + $0x58] sm:$0xff]
    %v1167 = vld [vmem:[#allocation2 + $0x60] sm:$0xff]
    %v1168 = vld [vmem:[#allocation2 + $0x68] sm:$0xff]
    %v1169 = vld [vmem:[#allocation2 + $0x70] sm:$0xff]
    %v1170 = vld [vmem:[#allocation2 + $0x78] sm:$0xff]
    %v1171 = vld [vmem:[#allocation2 + $0x80] sm:$0xff]
    %v1172 = vld [vmem:[#allocation2 + $0x88] sm:$0xff]
    %v1173 = vld [vmem:[#allocation2 + $0x90] sm:$0xff]
    %v1174 = vld [vmem:[#allocation2 + $0x98] sm:$0xff]
    %v1175 = vld [vmem:[#allocation2 + $0xa0] sm:$0xff]
    %v1176 = vld [vmem:[#allocation2 + $0xa8] sm:$0xff]
    %v1177 = vld [vmem:[#allocation2 + $0xb0] sm:$0xff]
    %v1178 = vld [vmem:[#allocation2 + $0xb8] sm:$0xff]
    %v1179 = vld [vmem:[#allocation2 + $0xc0] sm:$0xff]
    %v1180 = vld [vmem:[#allocation2 + $0xc8] sm:$0xff]
    %v1181 = vld [vmem:[#allocation2 + $0xd0] sm:$0xff]
    %v1182 = vld [vmem:[#allocation2 + $0xd8] sm:$0xff]
    %v1183 = vld [vmem:[#allocation2 + $0xe0] sm:$0xff]
    %v1184 = vld [vmem:[#allocation2 + $0xe8] sm:$0xff]
    %v1185 = vld [vmem:[#allocation2 + $0xf0] sm:$0xff]
    %v1186 = vld [vmem:[#allocation2 + $0xf8] sm:$0xff]
    %v1187 = vld [vmem:[#allocation2 + $0x100] sm:$0xff]
    %v1188 = vld [vmem:[#allocation2 + $0x108] sm:$0xff]
    %v1189 = vld [vmem:[#allocation2 + $0x110] sm:$0xff]
    %v1190 = vld [vmem:[#allocation2 + $0x118] sm:$0xff]
    %v1191 = vld [vmem:[#allocation2 + $0x120] sm:$0xff]
    %v1192 = vld [vmem:[#allocation2 + $0x128] sm:$0xff]
    %v1193 = vld [vmem:[#allocation2 + $0x130] sm:$0xff]
    %v1194 = vld [vmem:[#allocation2 + $0x138] sm:$0xff]
    %v1195 = vld [vmem:[#allocation2 + $0x140] sm:$0xff]
    %v1196 = vld [vmem:[#allocation2 + $0x148] sm:$0xff]
    %v1197 = vld [vmem:[#allocation2 + $0x150] sm:$0xff]
    %v1198 = vld [vmem:[#allocation2 + $0x158] sm:$0xff]
    %v1199 = vld [vmem:[#allocation2 + $0x160] sm:$0xff]
    %v1200 = vld [vmem:[#allocation2 + $0x168] sm:$0xff]
    %v1201 = vld [vmem:[#allocation2 + $0x170] sm:$0xff]
    %v1202 = vld [vmem:[#allocation2 + $0x178] sm:$0xff]
    %v1203 = vld [vmem:[#allocation2 + $0x180] sm:$0xff]
    %v1204 = vld [vmem:[#allocation2 + $0x188] sm:$0xff]
    %v1205 = vld [vmem:[#allocation2 + $0x190] sm:$0xff]
    %v1206 = vld [vmem:[#allocation2 + $0x198] sm:$0xff]
    %v1207 = vld [vmem:[#allocation2 + $0x1a0] sm:$0xff]
    %v1208 = vld [vmem:[#allocation2 + $0x1a8] sm:$0xff]
    %v1209 = vld [vmem:[#allocation2 + $0x1b0] sm:$0xff]
    %v1210 = vld [vmem:[#allocation2 + $0x1b8] sm:$0xff]
    %v1211 = vld [vmem:[#allocation2 + $0x1c0] sm:$0xff]
    %v1212 = vld [vmem:[#allocation2 + $0x1c8] sm:$0xff]
    %v1213 = vld [vmem:[#allocation2 + $0x1d0] sm:$0xff]
    %v1214 = vld [vmem:[#allocation2 + $0x1d8] sm:$0xff]
    %v1215 = vld [vmem:[#allocation2 + $0x1e0] sm:$0xff]
    %v1216 = vld [vmem:[#allocation2 + $0x1e8] sm:$0xff]
    %v1217 = vld [vmem:[#allocation2 + $0x1f0] sm:$0xff]
    %v1218 = vld [vmem:[#allocation2 + $0x1f8] sm:$0xff]
    %v1219 = vld [vmem:[#allocation5] sm:$0x3]
    %v1221 = vperm.slane %v1219, 0
    %v1222 = vperm.slane %v1219, 1
    %v1289 = vunpack.c.l.b16 %v1155
    %v1290 = vunpack.c.h.b16 %v1155
    %v1291 = vunpack.c.l.b16 %v1156
    %v1292 = vunpack.c.h.b16 %v1156
    %v1293 = vunpack.c.l.b16 %v1157
    %v1294 = vunpack.c.h.b16 %v1157
    %v1295 = vunpack.c.l.b16 %v1158
    %v1296 = vunpack.c.h.b16 %v1158
    %v1297 = vunpack.c.l.b16 %v1159
    %v1298 = vunpack.c.h.b16 %v1159
    %v1299 = vunpack.c.l.b16 %v1160
    %v1300 = vunpack.c.h.b16 %v1160
    %v1301 = vunpack.c.l.b16 %v1161
    %v1302 = vunpack.c.h.b16 %v1161
    %v1303 = vunpack.c.l.b16 %v1162
    %v1304 = vunpack.c.h.b16 %v1162
    %v1305 = vunpack.c.l.b16 %v1163
    %v1306 = vunpack.c.h.b16 %v1163
    %v1307 = vunpack.c.l.b16 %v1164
    %v1308 = vunpack.c.h.b16 %v1164
    %v1309 = vunpack.c.l.b16 %v1165
    %v1310 = vunpack.c.h.b16 %v1165
    %v1311 = vunpack.c.l.b16 %v1166
    %v1312 = vunpack.c.h.b16 %v1166
    %v1313 = vunpack.c.l.b16 %v1167
    %v1314 = vunpack.c.h.b16 %v1167
    %v1315 = vunpack.c.l.b16 %v1168
    %v1316 = vunpack.c.h.b16 %v1168
    %v1317 = vunpack.c.l.b16 %v1169
    %v1318 = vunpack.c.h.b16 %v1169
    %v1319 = vunpack.c.l.b16 %v1170
    %v1320 = vunpack.c.h.b16 %v1170
    %v1321 = vunpack.c.l.b16 %v1171
    %v1322 = vunpack.c.h.b16 %v1171
    %v1323 = vunpack.c.l.b16 %v1172
    %v1324 = vunpack.c.h.b16 %v1172
    %v1325 = vunpack.c.l.b16 %v1173
    %v1326 = vunpack.c.h.b16 %v1173
    %v1327 = vunpack.c.l.b16 %v1174
    %v1328 = vunpack.c.h.b16 %v1174
    %v1329 = vunpack.c.l.b16 %v1175
    %v1330 = vunpack.c.h.b16 %v1175
    %v1331 = vunpack.c.l.b16 %v1176
    %v1332 = vunpack.c.h.b16 %v1176
    %v1333 = vunpack.c.l.b16 %v1177
    %v1334 = vunpack.c.h.b16 %v1177
    %v1335 = vunpack.c.l.b16 %v1178
    %v1336 = vunpack.c.h.b16 %v1178
    %v1337 = vunpack.c.l.b16 %v1179
    %v1338 = vunpack.c.h.b16 %v1179
    %v1339 = vunpack.c.l.b16 %v1180
    %v1340 = vunpack.c.h.b16 %v1180
    %v1341 = vunpack.c.l.b16 %v1181
    %v1342 = vunpack.c.h.b16 %v1181
    %v1343 = vunpack.c.l.b16 %v1182
    %v1344 = vunpack.c.h.b16 %v1182
    %v1345 = vunpack.c.l.b16 %v1183
    %v1346 = vunpack.c.h.b16 %v1183
    %v1347 = vunpack.c.l.b16 %v1184
    %v1348 = vunpack.c.h.b16 %v1184
    %v1349 = vunpack.c.l.b16 %v1185
    %v1350 = vunpack.c.h.b16 %v1185
    %v1351 = vunpack.c.l.b16 %v1186
    %v1352 = vunpack.c.h.b16 %v1186
    %v1353 = vunpack.c.l.b16 %v1187
    %v1354 = vunpack.c.h.b16 %v1187
    %v1355 = vunpack.c.l.b16 %v1188
    %v1356 = vunpack.c.h.b16 %v1188
    %v1357 = vunpack.c.l.b16 %v1189
    %v1358 = vunpack.c.h.b16 %v1189
    %v1359 = vunpack.c.l.b16 %v1190
    %v1360 = vunpack.c.h.b16 %v1190
    %v1361 = vunpack.c.l.b16 %v1191
    %v1362 = vunpack.c.h.b16 %v1191
    %v1363 = vunpack.c.l.b16 %v1192
    %v1364 = vunpack.c.h.b16 %v1192
    %v1365 = vunpack.c.l.b16 %v1193
    %v1366 = vunpack.c.h.b16 %v1193
    %v1367 = vunpack.c.l.b16 %v1194
    %v1368 = vunpack.c.h.b16 %v1194
    %v1369 = vunpack.c.l.b16 %v1195
    %v1370 = vunpack.c.h.b16 %v1195
    %v1371 = vunpack.c.l.b16 %v1196
    %v1372 = vunpack.c.h.b16 %v1196
    %v1373 = vunpack.c.l.b16 %v1197
    %v1374 = vunpack.c.h.b16 %v1197
    %v1375 = vunpack.c.l.b16 %v1198
    %v1376 = vunpack.c.h.b16 %v1198
    %v1377 = vunpack.c.l.b16 %v1199
    %v1378 = vunpack.c.h.b16 %v1199
    %v1379 = vunpack.c.l.b16 %v1200
    %v1380 = vunpack.c.h.b16 %v1200
    %v1381 = vunpack.c.l.b16 %v1201
    %v1382 = vunpack.c.h.b16 %v1201
    %v1383 = vunpack.c.l.b16 %v1202
    %v1384 = vunpack.c.h.b16 %v1202
    %v1385 = vunpack.c.l.b16 %v1203
    %v1386 = vunpack.c.h.b16 %v1203
    %v1387 = vunpack.c.l.b16 %v1204
    %v1388 = vunpack.c.h.b16 %v1204
    %v1389 = vunpack.c.l.b16 %v1205
    %v1390 = vunpack.c.h.b16 %v1205
    %v1391 = vunpack.c.l.b16 %v1206
    %v1392 = vunpack.c.h.b16 %v1206
    %v1393 = vunpack.c.l.b16 %v1207
    %v1394 = vunpack.c.h.b16 %v1207
    %v1395 = vunpack.c.l.b16 %v1208
    %v1396 = vunpack.c.h.b16 %v1208
    %v1397 = vunpack.c.l.b16 %v1209
    %v1398 = vunpack.c.h.b16 %v1209
    %v1399 = vunpack.c.l.b16 %v1210
    %v1400 = vunpack.c.h.b16 %v1210
    %v1401 = vunpack.c.l.b16 %v1211
    %v1402 = vunpack.c.h.b16 %v1211
    %v1403 = vunpack.c.l.b16 %v1212
    %v1404 = vunpack.c.h.b16 %v1212
    %v1405 = vunpack.c.l.b16 %v1213
    %v1406 = vunpack.c.h.b16 %v1213
    %v1407 = vunpack.c.l.b16 %v1214
    %v1408 = vunpack.c.h.b16 %v1214
    %v1409 = vunpack.c.l.b16 %v1215
    %v1410 = vunpack.c.h.b16 %v1215
    %v1411 = vunpack.c.l.b16 %v1216
    %v1412 = vunpack.c.h.b16 %v1216
    %v1413 = vunpack.c.l.b16 %v1217
    %v1414 = vunpack.c.h.b16 %v1217
    %v1415 = vunpack.c.l.b16 %v1218
    %v1416 = vunpack.c.h.b16 %v1218
    %v1417 = vpack.c.b16 %v1291, %v1289
    %v1418 = vpack.c.b16 %v1292, %v1290
    %v1419 = vpack.c.b16 %v1295, %v1293
    %v1420 = vpack.c.b16 %v1296, %v1294
    %v1421 = vpack.c.b16 %v1299, %v1297
    %v1422 = vpack.c.b16 %v1300, %v1298
    %v1423 = vpack.c.b16 %v1303, %v1301
    %v1424 = vpack.c.b16 %v1304, %v1302
    %v1425 = vpack.c.b16 %v1307, %v1305
    %v1426 = vpack.c.b16 %v1308, %v1306
    %v1427 = vpack.c.b16 %v1311, %v1309
    %v1428 = vpack.c.b16 %v1312, %v1310
    %v1429 = vpack.c.b16 %v1315, %v1313
    %v1430 = vpack.c.b16 %v1316, %v1314
    %v1431 = vpack.c.b16 %v1319, %v1317
    %v1432 = vpack.c.b16 %v1320, %v1318
    %v1433 = vpack.c.b16 %v1323, %v1321
    %v1434 = vpack.c.b16 %v1324, %v1322
    %v1435 = vpack.c.b16 %v1327, %v1325
    %v1436 = vpack.c.b16 %v1328, %v1326
    %v1437 = vpack.c.b16 %v1331, %v1329
    %v1438 = vpack.c.b16 %v1332, %v1330
    %v1439 = vpack.c.b16 %v1335, %v1333
    %v1440 = vpack.c.b16 %v1336, %v1334
    %v1441 = vpack.c.b16 %v1339, %v1337
    %v1442 = vpack.c.b16 %v1340, %v1338
    %v1443 = vpack.c.b16 %v1343, %v1341
    %v1444 = vpack.c.b16 %v1344, %v1342
    %v1445 = vpack.c.b16 %v1347, %v1345
    %v1446 = vpack.c.b16 %v1348, %v1346
    %v1447 = vpack.c.b16 %v1351, %v1349
    %v1448 = vpack.c.b16 %v1352, %v1350
    %v1449 = vpack.c.b16 %v1355, %v1353
    %v1450 = vpack.c.b16 %v1356, %v1354
    %v1451 = vpack.c.b16 %v1359, %v1357
    %v1452 = vpack.c.b16 %v1360, %v1358
    %v1453 = vpack.c.b16 %v1363, %v1361
    %v1454 = vpack.c.b16 %v1364, %v1362
    %v1455 = vpack.c.b16 %v1367, %v1365
    %v1456 = vpack.c.b16 %v1368, %v1366
    %v1457 = vpack.c.b16 %v1371, %v1369
    %v1458 = vpack.c.b16 %v1372, %v1370
    %v1459 = vpack.c.b16 %v1375, %v1373
    %v1460 = vpack.c.b16 %v1376, %v1374
    %v1461 = vpack.c.b16 %v1379, %v1377
    %v1462 = vpack.c.b16 %v1380, %v1378
    %v1463 = vpack.c.b16 %v1383, %v1381
    %v1464 = vpack.c.b16 %v1384, %v1382
    %v1465 = vpack.c.b16 %v1387, %v1385
    %v1466 = vpack.c.b16 %v1388, %v1386
    %v1467 = vpack.c.b16 %v1391, %v1389
    %v1468 = vpack.c.b16 %v1392, %v1390
    %v1469 = vpack.c.b16 %v1395, %v1393
    %v1470 = vpack.c.b16 %v1396, %v1394
    %v1471 = vpack.c.b16 %v1399, %v1397
    %v1472 = vpack.c.b16 %v1400, %v1398
    %v1473 = vpack.c.b16 %v1403, %v1401
    %v1474 = vpack.c.b16 %v1404, %v1402
    %v1475 = vpack.c.b16 %v1407, %v1405
    %v1476 = vpack.c.b16 %v1408, %v1406
    %v1477 = vpack.c.b16 %v1411, %v1409
    %v1478 = vpack.c.b16 %v1412, %v1410
    %v1479 = vpack.c.b16 %v1415, %v1413
    %v1480 = vpack.c.b16 %v1416, %v1414
    %1545 = vmatpush.bf16.msra.mxu0 %v1431
    %1546 = vmatpush.bf16.msra.mxu0 %v1429
    %1547 = vmatpush.bf16.msra.mxu0 %v1427
    %1548 = vmatpush.bf16.msra.mxu0 %v1425
    %1549 = vmatpush.bf16.msra.mxu0 %v1423
    %1550 = vmatpush.bf16.msra.mxu0 %v1421
    %1551 = vmatpush.bf16.msra.mxu0 %v1419
    %1552 = vmatpush.bf16.msra.mxu0 %v1417
    %1553 = vmatmul.bf16.gmra.mxu0 %v1151
    %v1554 = vpop.f32.mrf.mxu0
    %v1555 = vadd.f32 %v1221, %v1554
    %v1556 = vpop.f32.mrf.mxu0
    %1557 = vdwg.mxu0
    %1558 = vmatpush.bf16.msra.mxu0 %v1447
    %1559 = vmatpush.bf16.msra.mxu0 %v1445
    %1560 = vmatpush.bf16.msra.mxu0 %v1443
    %1561 = vmatpush.bf16.msra.mxu0 %v1441
    %1562 = vmatpush.bf16.msra.mxu0 %v1439
    %1563 = vmatpush.bf16.msra.mxu0 %v1437
    %1564 = vmatpush.bf16.msra.mxu0 %v1435
    %1565 = vmatpush.bf16.msra.mxu0 %v1433
    %1566 = vmatmul.bf16.gmra.mxu0 %v1152
    %v1567 = vpop.f32.mrf.mxu0
    %v1568 = vadd.f32 %v1555, %v1567
    %v1569 = vpop.f32.mrf.mxu0
    %1570 = vdwg.mxu0
    %1571 = vmatpush.bf16.msra.mxu0 %v1463
    %1572 = vmatpush.bf16.msra.mxu0 %v1461
    %1573 = vmatpush.bf16.msra.mxu0 %v1459
    %1574 = vmatpush.bf16.msra.mxu0 %v1457
    %1575 = vmatpush.bf16.msra.mxu0 %v1455
    %1576 = vmatpush.bf16.msra.mxu0 %v1453
    %1577 = vmatpush.bf16.msra.mxu0 %v1451
    %1578 = vmatpush.bf16.msra.mxu0 %v1449
    %1579 = vmatmul.bf16.gmra.mxu0 %v1153
    %v1580 = vpop.f32.mrf.mxu0
    %v1581 = vadd.f32 %v1568, %v1580
    %v1582 = vpop.f32.mrf.mxu0
    %1583 = vdwg.mxu0
    %1584 = vmatpush.bf16.msra.mxu0 %v1479
    %1585 = vmatpush.bf16.msra.mxu0 %v1477
    %1586 = vmatpush.bf16.msra.mxu0 %v1475
    %1587 = vmatpush.bf16.msra.mxu0 %v1473
    %1588 = vmatpush.bf16.msra.mxu0 %v1471
    %1589 = vmatpush.bf16.msra.mxu0 %v1469
    %1590 = vmatpush.bf16.msra.mxu0 %v1467
    %1591 = vmatpush.bf16.msra.mxu0 %v1465
    %1592 = vmatmul.bf16.gmra.mxu0 %v1154
    %v1593 = vpop.f32.mrf.mxu0
    %v1594 = vadd.f32 %v1581, %v1593
    %v1595 = vpop.f32.mrf.mxu0
    %1596 = vdwg.mxu0
    %1597 = vmatpush.bf16.msra.mxu0 %v1432
    %1598 = vmatpush.bf16.msra.mxu0 %v1430
    %1599 = vmatpush.bf16.msra.mxu0 %v1428
    %1600 = vmatpush.bf16.msra.mxu0 %v1426
    %1601 = vmatpush.bf16.msra.mxu0 %v1424
    %1602 = vmatpush.bf16.msra.mxu0 %v1422
    %1603 = vmatpush.bf16.msra.mxu0 %v1420
    %1604 = vmatpush.bf16.msra.mxu0 %v1418
    %1605 = vmatmul.bf16.gmra.mxu0 %v1151
    %v1606 = vpop.f32.mrf.mxu0
    %v1607 = vadd.f32 %v1222, %v1606
    %v1608 = vpop.f32.mrf.mxu0
    %1609 = vdwg.mxu0
    %1610 = vmatpush.bf16.msra.mxu0 %v1448
    %1611 = vmatpush.bf16.msra.mxu0 %v1446
    %1612 = vmatpush.bf16.msra.mxu0 %v1444
    %1613 = vmatpush.bf16.msra.mxu0 %v1442
    %1614 = vmatpush.bf16.msra.mxu0 %v1440
    %1615 = vmatpush.bf16.msra.mxu0 %v1438
    %1616 = vmatpush.bf16.msra.mxu0 %v1436
    %1617 = vmatpush.bf16.msra.mxu0 %v1434
    %1618 = vmatmul.bf16.gmra.mxu0 %v1152
    %v1619 = vpop.f32.mrf.mxu0
    %v1620 = vadd.f32 %v1607, %v1619
    %v1621 = vpop.f32.mrf.mxu0
    %1622 = vdwg.mxu0
    %1623 = vmatpush.bf16.msra.mxu0 %v1464
    %1624 = vmatpush.bf16.msra.mxu0 %v1462
    %1625 = vmatpush.bf16.msra.mxu0 %v1460
    %1626 = vmatpush.bf16.msra.mxu0 %v1458
    %1627 = vmatpush.bf16.msra.mxu0 %v1456
    %1628 = vmatpush.bf16.msra.mxu0 %v1454
    %1629 = vmatpush.bf16.msra.mxu0 %v1452
    %1630 = vmatpush.bf16.msra.mxu0 %v1450
    %1631 = vmatmul.bf16.gmra.mxu0 %v1153
    %v1632 = vpop.f32.mrf.mxu0
    %v1633 = vadd.f32 %v1620, %v1632
    %v1634 = vpop.f32.mrf.mxu0
    %1635 = vdwg.mxu0
    %1636 = vmatpush.bf16.msra.mxu0 %v1480
    %1637 = vmatpush.bf16.msra.mxu0 %v1478
    %1638 = vmatpush.bf16.msra.mxu0 %v1476
    %1639 = vmatpush.bf16.msra.mxu0 %v1474
    %1640 = vmatpush.bf16.msra.mxu0 %v1472
    %1641 = vmatpush.bf16.msra.mxu0 %v1470
    %1642 = vmatpush.bf16.msra.mxu0 %v1468
    %1643 = vmatpush.bf16.msra.mxu0 %v1466
    %1644 = vmatmul.bf16.gmra.mxu0 %v1154
    %v1645 = vpop.f32.mrf.mxu0
    %v1646 = vadd.f32 %v1633, %v1645
    %v1647 = vpop.f32.mrf.mxu0
    %1648 = vdwg.mxu0
    %v1649 = vmax.f32 %v1594, 0.0
    %v1650 = vmax.f32 %v1646, 0.0
    %s1651 = scalar_lea.vmem [#allocation5], 2
    %v1652 = vld [vmem:[%s1651] sm:$0x3]
    %v1654 = vperm.slane %v1652, 0
    %v1655 = vperm.slane %v1652, 1
    %v1658 = vmul.f32 %v1649, %v1654
    %v1659 = vmul.f32 %v1650, %v1655
    %s1660 = scalar_lea.vmem [#allocation5], 4
    %v1661 = vld [vmem:[%s1660] sm:$0x3]
    %v1663 = vperm.slane %v1661, 0
    %v1664 = vperm.slane %v1661, 1
    %v1667 = vadd.f32 %v1658, %v1663
    %v1668 = vadd.f32 %v1659, %v1664
    %v1669 = vpack.c.bf16 %v1667, %v1667
    %v1670 = vpack.c.bf16 %v1668, %v1668
    %v1671 = vld [vmem:[%s5] sm:$0xf]
    %v1672 = vld [vmem:[%s5 + $0x4] sm:$0xf]
    %v1673 = vld [vmem:[%s5 + $0x8] sm:$0xf]
    %v1674 = vld [vmem:[%s5 + $0xc] sm:$0xf]
    %v1675 = vld [vmem:[%s5 + $0x10] sm:$0xf]
    %v1676 = vld [vmem:[%s5 + $0x14] sm:$0xf]
    %v1677 = vld [vmem:[%s5 + $0x18] sm:$0xf]
    %v1678 = vld [vmem:[%s5 + $0x1c] sm:$0xf]
    %v1679 = vld [vmem:[%s5 + $0x20] sm:$0xf]
    %v1680 = vld [vmem:[%s5 + $0x24] sm:$0xf]
    %v1681 = vld [vmem:[%s5 + $0x28] sm:$0xf]
    %v1682 = vld [vmem:[%s5 + $0x2c] sm:$0xf]
    %v1683 = vld [vmem:[%s5 + $0x30] sm:$0xf]
    %v1684 = vld [vmem:[%s5 + $0x34] sm:$0xf]
    %v1685 = vld [vmem:[%s5 + $0x38] sm:$0xf]
    %v1686 = vld [vmem:[%s5 + $0x3c] sm:$0xf]
    %v1687 = vld [vmem:[%s5 + $0x40] sm:$0xf]
    %v1688 = vld [vmem:[%s5 + $0x44] sm:$0xf]
    %v1689 = vld [vmem:[%s5 + $0x48] sm:$0xf]
    %v1690 = vld [vmem:[%s5 + $0x4c] sm:$0xf]
    %v1691 = vld [vmem:[%s5 + $0x50] sm:$0xf]
    %v1692 = vld [vmem:[%s5 + $0x54] sm:$0xf]
    %v1693 = vld [vmem:[%s5 + $0x58] sm:$0xf]
    %v1694 = vld [vmem:[%s5 + $0x5c] sm:$0xf]
    %v1695 = vld [vmem:[%s5 + $0x60] sm:$0xf]
    %v1696 = vld [vmem:[%s5 + $0x64] sm:$0xf]
    %v1697 = vld [vmem:[%s5 + $0x68] sm:$0xf]
    %v1698 = vld [vmem:[%s5 + $0x6c] sm:$0xf]
    %v1699 = vld [vmem:[%s5 + $0x70] sm:$0xf]
    %v1700 = vld [vmem:[%s5 + $0x74] sm:$0xf]
    %v1701 = vld [vmem:[%s5 + $0x78] sm:$0xf]
    %v1702 = vld [vmem:[%s5 + $0x7c] sm:$0xf]
    %v1703 = vld [vmem:[%s6] sm:$0x1]
    %v1705 = vperm.slane %v1703, 0
    %v1739 = vunpack.c.l.b16 %v1671
    %v1740 = vunpack.c.l.b16 %v1672
    %v1741 = vunpack.c.l.b16 %v1673
    %v1742 = vunpack.c.l.b16 %v1674
    %v1743 = vunpack.c.l.b16 %v1675
    %v1744 = vunpack.c.l.b16 %v1676
    %v1745 = vunpack.c.l.b16 %v1677
    %v1746 = vunpack.c.l.b16 %v1678
    %v1747 = vunpack.c.l.b16 %v1679
    %v1748 = vunpack.c.l.b16 %v1680
    %v1749 = vunpack.c.l.b16 %v1681
    %v1750 = vunpack.c.l.b16 %v1682
    %v1751 = vunpack.c.l.b16 %v1683
    %v1752 = vunpack.c.l.b16 %v1684
    %v1753 = vunpack.c.l.b16 %v1685
    %v1754 = vunpack.c.l.b16 %v1686
    %v1755 = vunpack.c.l.b16 %v1687
    %v1756 = vunpack.c.l.b16 %v1688
    %v1757 = vunpack.c.l.b16 %v1689
    %v1758 = vunpack.c.l.b16 %v1690
    %v1759 = vunpack.c.l.b16 %v1691
    %v1760 = vunpack.c.l.b16 %v1692
    %v1761 = vunpack.c.l.b16 %v1693
    %v1762 = vunpack.c.l.b16 %v1694
    %v1763 = vunpack.c.l.b16 %v1695
    %v1764 = vunpack.c.l.b16 %v1696
    %v1765 = vunpack.c.l.b16 %v1697
    %v1766 = vunpack.c.l.b16 %v1698
    %v1767 = vunpack.c.l.b16 %v1699
    %v1768 = vunpack.c.l.b16 %v1700
    %v1769 = vunpack.c.l.b16 %v1701
    %v1770 = vunpack.c.l.b16 %v1702
    %v1771 = vpack.c.b16 %v1740, %v1739
    %v1772 = vpack.c.b16 %v1742, %v1741
    %v1773 = vpack.c.b16 %v1744, %v1743
    %v1774 = vpack.c.b16 %v1746, %v1745
    %v1775 = vpack.c.b16 %v1748, %v1747
    %v1776 = vpack.c.b16 %v1750, %v1749
    %v1777 = vpack.c.b16 %v1752, %v1751
    %v1778 = vpack.c.b16 %v1754, %v1753
    %v1779 = vpack.c.b16 %v1756, %v1755
    %v1780 = vpack.c.b16 %v1758, %v1757
    %v1781 = vpack.c.b16 %v1760, %v1759
    %v1782 = vpack.c.b16 %v1762, %v1761
    %v1783 = vpack.c.b16 %v1764, %v1763
    %v1784 = vpack.c.b16 %v1766, %v1765
    %v1785 = vpack.c.b16 %v1768, %v1767
    %v1786 = vpack.c.b16 %v1770, %v1769
    %1803 = vmatpush.bf16.msra.mxu0 %v1778
    %1804 = vmatpush.bf16.msra.mxu0 %v1777
    %1805 = vmatpush.bf16.msra.mxu0 %v1776
    %1806 = vmatpush.bf16.msra.mxu0 %v1775
    %1807 = vmatpush.bf16.msra.mxu0 %v1774
    %1808 = vmatpush.bf16.msra.mxu0 %v1773
    %1809 = vmatpush.bf16.msra.mxu0 %v1772
    %1810 = vmatpush.bf16.msra.mxu0 %v1771
    %1811 = vmatmul.bf16.gmra.mxu0 %v1669
    %v1812 = vpop.f32.mrf.mxu0
    %v1813 = vadd.f32 %v1705, %v1812
    %v1814 = vpop.f32.mrf.mxu0
    %1815 = vdwg.mxu0
    %1816 = vmatpush.bf16.msra.mxu0 %v1786
    %1817 = vmatpush.bf16.msra.mxu0 %v1785
    %1818 = vmatpush.bf16.msra.mxu0 %v1784
    %1819 = vmatpush.bf16.msra.mxu0 %v1783
    %1820 = vmatpush.bf16.msra.mxu0 %v1782
    %1821 = vmatpush.bf16.msra.mxu0 %v1781
    %1822 = vmatpush.bf16.msra.mxu0 %v1780
    %1823 = vmatpush.bf16.msra.mxu0 %v1779
    %1824 = vmatmul.bf16.gmra.mxu0 %v1670
    %v1825 = vpop.f32.mrf.mxu0
    %v1826 = vadd.f32 %v1813, %v1825
    %v1827 = vpop.f32.mrf.mxu0
    %1828 = vdwg.mxu0
    %v1829 = vmax.f32 %v1826, 0.0
    %s1830 = scalar_lea.vmem %s6, 1
    %v1831 = vld [vmem:[%s1830] sm:$0x1]
    %v1833 = vperm.slane %v1831, 0
    %v1835 = vmul.f32 %v1829, %v1833
    %s1836 = scalar_lea.vmem %s6, 2
    %v1837 = vld [vmem:[%s1836] sm:$0x1]
    %v1839 = vperm.slane %v1837, 0
    %v1841 = vadd.f32 %v1835, %v1839
    %v1842 = vpack.c.bf16 %v1841, %v1841
    %v1843 = vld [vmem:[%s7] sm:$0xf]
    %v1844 = vld [vmem:[%s7 + $0x4] sm:$0xf]
    %v1845 = vld [vmem:[%s7 + $0x8] sm:$0xf]
    %v1846 = vld [vmem:[%s7 + $0xc] sm:$0xf]
    %v1847 = vld [vmem:[%s7 + $0x10] sm:$0xf]
    %v1848 = vld [vmem:[%s7 + $0x14] sm:$0xf]
    %v1849 = vld [vmem:[%s7 + $0x18] sm:$0xf]
    %v1850 = vld [vmem:[%s7 + $0x1c] sm:$0xf]
    %v1851 = vld [vmem:[%s7 + $0x20] sm:$0xf]
    %v1852 = vld [vmem:[%s7 + $0x24] sm:$0xf]
    %v1853 = vld [vmem:[%s7 + $0x28] sm:$0xf]
    %v1854 = vld [vmem:[%s7 + $0x2c] sm:$0xf]
    %v1855 = vld [vmem:[%s7 + $0x30] sm:$0xf]
    %v1856 = vld [vmem:[%s7 + $0x34] sm:$0xf]
    %v1857 = vld [vmem:[%s7 + $0x38] sm:$0xf]
    %v1858 = vld [vmem:[%s7 + $0x3c] sm:$0xf]
    %v1859 = vld [vmem:[#allocation7] sm:$0x1]
    %v1861 = vperm.slane %v1859, 0
    %v1879 = vunpack.c.l.b16 %v1843
    %v1880 = vunpack.c.l.b16 %v1844
    %v1881 = vunpack.c.l.b16 %v1845
    %v1882 = vunpack.c.l.b16 %v1846
    %v1883 = vunpack.c.l.b16 %v1847
    %v1884 = vunpack.c.l.b16 %v1848
    %v1885 = vunpack.c.l.b16 %v1849
    %v1886 = vunpack.c.l.b16 %v1850
    %v1887 = vunpack.c.l.b16 %v1851
    %v1888 = vunpack.c.l.b16 %v1852
    %v1889 = vunpack.c.l.b16 %v1853
    %v1890 = vunpack.c.l.b16 %v1854
    %v1891 = vunpack.c.l.b16 %v1855
    %v1892 = vunpack.c.l.b16 %v1856
    %v1893 = vunpack.c.l.b16 %v1857
    %v1894 = vunpack.c.l.b16 %v1858
    %v1895 = vpack.c.b16 %v1880, %v1879
    %v1896 = vpack.c.b16 %v1882, %v1881
    %v1897 = vpack.c.b16 %v1884, %v1883
    %v1898 = vpack.c.b16 %v1886, %v1885
    %v1899 = vpack.c.b16 %v1888, %v1887
    %v1900 = vpack.c.b16 %v1890, %v1889
    %v1901 = vpack.c.b16 %v1892, %v1891
    %v1902 = vpack.c.b16 %v1894, %v1893
    %1911 = vmatpush.bf16.msra.mxu0 %v1902
    %1912 = vmatpush.bf16.msra.mxu0 %v1901
    %1913 = vmatpush.bf16.msra.mxu0 %v1900
    %1914 = vmatpush.bf16.msra.mxu0 %v1899
    %1915 = vmatpush.bf16.msra.mxu0 %v1898
    %1916 = vmatpush.bf16.msra.mxu0 %v1897
    %1917 = vmatpush.bf16.msra.mxu0 %v1896
    %1918 = vmatpush.bf16.msra.mxu0 %v1895
    %1919 = vmatmul.bf16.gmra.mxu0 %v1842
    %v1920 = vpop.f32.mrf.mxu0
    %v1921 = vadd.f32 %v1861, %v1920
    %v1922 = vpop.f32.mrf.mxu0
    %1923 = vdwg.mxu0
    %v1924 = vmax.f32 %v1921, 0.0
    %s1925 = scalar_lea.vmem [#allocation7], 1
    %v1926 = vld [vmem:[%s1925] sm:$0x1]
    %v1928 = vperm.slane %v1926, 0
    %v1930 = vmul.f32 %v1924, %v1928
    %s1931 = scalar_lea.vmem [#allocation7], 2
    %v1932 = vld [vmem:[%s1931] sm:$0x1]
    %v1934 = vperm.slane %v1932, 0
    %v1936 = vadd.f32 %v1930, %v1934
    %v1937 = vpack.c.bf16 %v1936, %v1936
    %v1938 = vld [vmem:[#allocation8] sm:$0xf]
    %v1939 = vld [vmem:[#allocation8 + $0x4] sm:$0xf]
    %v1940 = vld [vmem:[#allocation8 + $0x8] sm:$0xf]
    %v1941 = vld [vmem:[#allocation8 + $0xc] sm:$0xf]
    %v1942 = vld [vmem:[#allocation8 + $0x10] sm:$0xf]
    %v1943 = vld [vmem:[#allocation8 + $0x14] sm:$0xf]
    %v1944 = vld [vmem:[#allocation8 + $0x18] sm:$0xf]
    %v1945 = vld [vmem:[#allocation8 + $0x1c] sm:$0xf]
    %v1946 = vld [vmem:[#allocation10] sm:$0x1]
    %v1948 = vperm.slane %v1946, 0
    %v1958 = vunpack.c.l.b16 %v1938
    %v1959 = vunpack.c.l.b16 %v1939
    %v1960 = vunpack.c.l.b16 %v1940
    %v1961 = vunpack.c.l.b16 %v1941
    %v1962 = vunpack.c.l.b16 %v1942
    %v1963 = vunpack.c.l.b16 %v1943
    %v1964 = vunpack.c.l.b16 %v1944
    %v1965 = vunpack.c.l.b16 %v1945
    %v1966 = vpack.c.b16 %v1959, %v1958
    %v1967 = vpack.c.b16 %v1961, %v1960
    %v1968 = vpack.c.b16 %v1963, %v1962
    %v1969 = vpack.c.b16 %v1965, %v1964
    %vm1974 = vcmask 523264
    %v1976 = vsel %vm1974, %v1937, 0
    %1978 = vmatpush.bf16.msra.mxu0 0
    %1979 = vmatpush.bf16.msra.mxu0 0
    %1980 = vmatpush.bf16.msra.mxu0 0
    %1981 = vmatpush.bf16.msra.mxu0 0
    %1982 = vmatpush.bf16.msra.mxu0 %v1969
    %1983 = vmatpush.bf16.msra.mxu0 %v1968
    %1984 = vmatpush.bf16.msra.mxu0 %v1967
    %1985 = vmatpush.bf16.msra.mxu0 %v1966
    %1986 = vmatmul.bf16.gmra.mxu0 %v1976
    %v1987 = vpop.f32.mrf.mxu0
    %v1988 = vadd.f32 %v1948, %v1987
    %v1989 = vpop.f32.mrf.mxu0
    %1990 = vdwg.mxu0
    %1991 = vst [vmem:[#allocation11] sm:$0x3] %v1988
    // Predicated region
    $region66: #{audio_classifier_forward.1} parent=1 // pred_check
      _
    $region67: #{audio_classifier_forward.1} parent=1 // pred_check_branch
      %1993 = sbr.rel (0) target = $region69
    $region68: #{audio_classifier_forward.1} parent=1 // pred_region
      %1995 = vsyncadd [#allocation4], 0
      %s1997 = sshll.u32 [#allocation11], 4
      %s1998 = int_to_ptr.vmem [resolvable:$true] %s1997
      %s1999 = sshll.u32 %s11, 4
      %s2000 = int_to_ptr.hbm [resolvable:$true] %s1999
      %2002 = dma.vmem_to_hbm [thread:$0]  %s1998, 32, %s2000, [#allocation4]
    $region69: #{audio_classifier_forward.1} parent=1 // pred_fallthru
      _
    // Predicated region
    $region70: #{audio_classifier_forward.1} parent=1 // pred_check
      _
    $region71: #{audio_classifier_forward.1} parent=1 // pred_check_branch
      %2004 = sbr.rel (0) target = $region73
    $region72: #{audio_classifier_forward.1} parent=1 // pred_region
      %2006 = dma.done [#allocation4], 32
    $region73: #{audio_classifier_forward.1} parent=1 // pred_fallthru
      _
    %2007 = vsyncpa [#allocation3], 1
    %2008 = vsyncpa [#allocation6], 1
    %2009 = vsyncpa [#allocation9], 1
    %2010 = vsyncpa [#allocation4], 1

</llo_original>
